<compile_context>
chip_gen: v6e
topology: v6e:2x2x1
jax: 0.10.0
libtpu: 0.0.40
codegen_flags: <defaults>
</compile_context>

<pallas_src>
import jax
import jax.numpy as jnp
import numpy as np
from jax.experimental import pallas as pl
from jax.experimental.pallas import tpu as pltpu

CLIP_MAX = 10.0


def _round_up(v, m):
    return (v + m - 1) // m * m


# --------------------------------------------------------------------------
# Parameter packing: one bf16 weight slab + one f32 bias/gamma/beta slab.
# --------------------------------------------------------------------------
def _pack_model(params, latent_dim):
    f32, bf16 = jnp.float32, jnp.bfloat16
    enc_z, enc_l = params["enc_z"], params["enc_l"]
    L = latent_dim
    G = enc_z[0][0].shape[0]
    dz0 = enc_z[0][0].shape[1]
    dl0 = enc_l[0][0].shape[1]
    dz0_pad = _round_up(dz0, 128)          # lane-aligned z/l split (guardrail)
    h0_cols = dz0_pad + dl0
    dz_last = enc_z[-1][0].shape[1]
    dl_last = enc_l[-1][0].shape[1]
    head_rows, head_cols = dz_last + dl_last, 2 * L + 2

    # --- fused first encoder layer (z cols [0:dz0], l cols [dz0_pad:...]) ---
    w0 = jnp.zeros((G, h0_cols), f32)
    w0 = w0.at[:, :dz0].set(enc_z[0][0])
    w0 = w0.at[:, dz0_pad:dz0_pad + dl0].set(enc_l[0][0])
    p0 = jnp.zeros((3, h0_cols), f32)                      # rows: bias, gamma, beta
    p0 = p0.at[0:1, :dz0].set(enc_z[0][1])
    p0 = p0.at[1:3, :dz0].set(enc_z[0][2])
    p0 = p0.at[0:1, dz0_pad:dz0_pad + dl0].set(enc_l[0][1])
    p0 = p0.at[1:3, dz0_pad:dz0_pad + dl0].set(enc_l[0][2])
    if dz0_pad > dz0:
        p0 = p0.at[1, dz0:dz0_pad].set(1.0)                # gamma=1 on pad cols

    w_blocks, p_blocks = [w0], [p0]
    z_extra_dims, l_extra_dims = [], []
    for (w, b, gb) in enc_z[1:]:
        w_blocks.append(w)
        p_blocks.append(jnp.concatenate([b, gb], axis=0))
        z_extra_dims.append((w.shape[0], w.shape[1]))
    for (w, b, gb) in enc_l[1:]:
        w_blocks.append(w)
        p_blocks.append(jnp.concatenate([b, gb], axis=0))
        l_extra_dims.append((w.shape[0], w.shape[1]))

    # --- fused block-diagonal heads: cols [z_mean | z_logvar | l_mean | l_logvar]
    wh = jnp.zeros((head_rows, head_cols), f32)
    wh = wh.at[:dz_last, 0:L].set(params["w_zm"])
    wh = wh.at[:dz_last, L:2 * L].set(params["w_zv"])
    wh = wh.at[dz_last:, 2 * L:2 * L + 1].set(params["w_lm"])
    wh = wh.at[dz_last:, 2 * L + 1:2 * L + 2].set(params["w_lv"])
    bh = jnp.concatenate([params["b_zm"], params["b_zv"],
                          params["b_lm"], params["b_lv"]], axis=1)
    w_blocks.append(wh)
    p_blocks.append(bh)

    # --- decoder (bias-free linear + BN gamma/beta) ---
    w_blocks.append(params["w_d"])
    p_blocks.append(params["gb_d"])

    width = _round_up(max(b.shape[1] for b in w_blocks + p_blocks), 128)

    def place(blocks, row_align, dtype):
        offs, r = [], 0
        for blk in blocks:
            offs.append(r)
            r += _round_up(blk.shape[0], row_align)
        slab = jnp.zeros((r, width), f32)
        for off, blk in zip(offs, blocks):
            slab = slab.at[off:off + blk.shape[0], 0:blk.shape[1]].set(blk)
        return slab.astype(dtype), offs

    w_slab, w_offs = place(w_blocks, 16, bf16)   # 16-row align: bf16 sublane tile
    p_slab, p_offs = place(p_blocks, 8, f32)     # 8-row align: f32 sublane tile

    meta = dict(G=G, L=L, dz0=dz0, dl0=dl0, dz0_pad=dz0_pad, h0_cols=h0_cols,
                head_rows=head_rows, head_cols=head_cols,
                z_extra_dims=z_extra_dims, l_extra_dims=l_extra_dims,
                w_offs=w_offs, p_offs=p_offs)
    return w_slab, p_slab, meta


# --------------------------------------------------------------------------
# Kernel builder (all offsets are static Python ints closed over).
# --------------------------------------------------------------------------
def _make_kernel(meta, norm_eps, use_masks, pack_w):
    bf16, f32 = jnp.bfloat16, jnp.float32
    L, G = meta["L"], meta["G"]
    dz0, dl0, dz0_pad = meta["dz0"], meta["dl0"], meta["dz0_pad"]
    h0_cols = meta["h0_cols"]
    w_offs, p_offs = meta["w_offs"], meta["p_offs"]
    nz, nl = len(meta["z_extra_dims"]), len(meta["l_extra_dims"])
    head_rows, head_cols = meta["head_rows"], meta["head_cols"]

    def kernel(*refs):
        if use_masks:
            w_ref, p_ref, d_ref, m_ref, pack_ref, y_ref = refs
        else:
            w_ref, p_ref, d_ref, pack_ref, y_ref = refs

        def batchnorm(h, gamma, beta):
            # TODO(synk): at scRNA-scale G compute column sums via a ones-row
            # MXU matmul instead of the axis-0 VPU/XLU reduction.
            mu = jnp.mean(h, axis=0, keepdims=True)
            hc = h - mu
            var = jnp.mean(hc * hc, axis=0, keepdims=True)      # biased var
            return hc * jax.lax.rsqrt(var + norm_eps) * gamma + beta

        def dense_bn_relu(h, w_off, din, dout, p_off):
            w = w_ref[w_off:w_off + din, 0:dout]                 # static slice
            p = p_ref[p_off:p_off + 3, 0:dout]                   # bias/gamma/beta
            h = jnp.dot(h.astype(bf16), w, preferred_element_type=f32) + p[0:1]
            return jnp.maximum(batchnorm(h, p[1:2], p[2:3]), 0.0)

        x = d_ref[:, 0:G].astype(bf16)

        # ---- fused first encoder layer of both branches ----
        h0 = dense_bn_relu(x, w_offs[0], G, h0_cols, p_offs[0])
        h_z = h0[:, 0:dz0]
        h_l = h0[:, dz0_pad:dz0_pad + dl0]
        if use_masks:
            h_z = h_z * m_ref[:, meta["mz_offs"][0]:meta["mz_offs"][0] + dz0]
            h_l = h_l * m_ref[:, meta["ml_offs"][0]:meta["ml_offs"][0] + dl0]

        # ---- z-branch tail ----
        for k, (din, dout) in enumerate(meta["z_extra_dims"]):
            i = 1 + k
            h_z = dense_bn_relu(h_z, w_offs[i], din, dout, p_offs[i])
            if use_masks:
                off = meta["mz_offs"][1 + k]
                h_z = h_z * m_ref[:, off:off + dout]

        # ---- l-branch tail ----
        for k, (din, dout) in enumerate(meta["l_extra_dims"]):
            i = 1 + nz + k
            h_l = dense_bn_relu(h_l, w_offs[i], din, dout, p_offs[i])
            if use_masks:
                off = meta["ml_offs"][1 + k]
                h_l = h_l * m_ref[:, off:off + dout]

        # ---- fused block-diagonal heads: one MXU pass ----
        hi = 1 + nz + nl
        wh = w_ref[w_offs[hi]:w_offs[hi] + head_rows, 0:head_cols]
        bh = p_ref[p_offs[hi]:p_offs[hi] + 1, 0:head_cols]
        hc = jnp.concatenate([h_z, h_l], axis=1).astype(bf16)
        hd = jnp.dot(hc, wh, preferred_element_type=f32) + bh
        z_mean = hd[:, 0:L]
        z_var = jnp.exp(jnp.minimum(hd[:, L:2 * L], CLIP_MAX))
        l_mean = hd[:, 2 * L:2 * L + 1]
        l_var = jnp.exp(jnp.minimum(hd[:, 2 * L + 1:2 * L + 2], CLIP_MAX))

        # ---- reparameterisation (matches torch: mean + var * eps) ----
        z_eps = d_ref[:, G:G + L]
        l_eps = d_ref[:, G + L:G + L + 1]
        z = z_mean + z_var * z_eps
        library = l_mean + l_var * l_eps

        # ---- decoder (bias-free linear + BN) and softmax ----
        di = hi + 1
        wd = w_ref[w_offs[di]:w_offs[di] + L, 0:G]
        gbd = p_ref[p_offs[di]:p_offs[di] + 2, 0:G]
        yd = jnp.dot(z.astype(bf16), wd, preferred_element_type=f32)
        yd = batchnorm(yd, gbd[0:1], gbd[1:2])
        e = jnp.exp(yd - jnp.max(yd, axis=-1, keepdims=True))
        denom = jnp.sum(e, axis=-1, keepdims=True)
        r = pl.reciprocal(denom, approx=True)
        r = r * (2.0 - denom * r)                # one Newton step (cheap, tight)
        sm = e * r
        y = jnp.exp(jnp.minimum(library, CLIP_MAX)) * sm

        # ---- outputs: ONE lane-dense packed store + the y store ----
        pad = pack_w - (3 * L + 3)
        packed = jnp.concatenate(
            [z_mean, z_var, z, l_mean, l_var, library,
             jnp.zeros((z.shape[0], pad), f32)], axis=1)
        pack_ref[...] = packed
        y_ref[...] = y

    return kernel


# --------------------------------------------------------------------------
# Wrapper
# --------------------------------------------------------------------------
def ldvae_forward(params, x, z_eps, l_eps, *, norm_eps, drop_masks=None):
    """drop_masks: optional {"z": [mask per z layer], "l": [...]} keep-masks
    already scaled by 1/keep (dropout disabled when None)."""
    f32 = jnp.float32
    B, G = x.shape
    L = params["w_zm"].shape[1]

    w_slab, p_slab, meta = _pack_model(params, L)
    d_slab = jnp.concatenate([x, z_eps, l_eps], axis=1).astype(f32)   # (B, G+L+1)

    inputs = [w_slab, p_slab, d_slab]
    use_masks = drop_masks is not None
    if use_masks:
        mz, ml = list(drop_masks["z"]), list(drop_masks["l"])
        cols, offs_z, offs_l = 0, [], []
        for m in mz:
            offs_z.append(cols)
            cols += m.shape[1]
        for m in ml:
            offs_l.append(cols)
            cols += m.shape[1]
        meta["mz_offs"], meta["ml_offs"] = offs_z, offs_l
        inputs.append(jnp.concatenate(mz + ml, axis=1).astype(f32))

    pack_w = max(128, _round_up(3 * L + 3, 128))
    out_shape = (jax.ShapeDtypeStruct((B, pack_w), f32),   # packed narrow outputs
                 jax.ShapeDtypeStruct((B, G), f32))        # y

    # Advisory cost estimate (lets XLA schedule the packing ops around the call).
    flops = 2 * B * (G * meta["h0_cols"]
                     + sum(di * do for di, do in meta["z_extra_dims"])
                     + sum(di * do for di, do in meta["l_extra_dims"])
                     + meta["head_rows"] * meta["head_cols"] + L * G)
    transcendentals = B * (G + 2 * L + 4)
    bytes_accessed = (sum(int(a.size) * a.dtype.itemsize for a in inputs)
                      + B * (pack_w + G) * 4)

    vmem = pl.BlockSpec(memory_space=pltpu.MemorySpace.VMEM)
    kernel = _make_kernel(meta, float(norm_eps), use_masks, pack_w)

    packed, y = pl.pallas_call(
        kernel,
        out_shape=out_shape,
        in_specs=[vmem] * len(inputs),
        out_specs=(vmem, vmem),
        compiler_params=pltpu.CompilerParams(vmem_limit_bytes=32 * 1024 * 1024),
        cost_estimate=pl.CostEstimate(flops=flops,
                                      transcendentals=transcendentals,
                                      bytes_accessed=bytes_accessed),
    )(*inputs)

    z_mean = packed[:, 0:L]
    z_var = packed[:, L:2 * L]
    z = packed[:, 2 * L:3 * L]
    l_mean = packed[:, 3 * L:3 * L + 1]
    l_var = packed[:, 3 * L + 1:3 * L + 2]
    library = packed[:, 3 * L + 2:3 * L + 3]
    return z_mean, z_var, z, l_mean, l_var, library, y


# --------------------------------------------------------------------------
# Pure-JAX reference (training-mode forward), mirroring the kernel's
# bf16-matmul / f32-accumulate numerics and the same dropout masks.
# --------------------------------------------------------------------------
def ldvae_ref(params, x, z_eps, l_eps, norm_eps, drop_masks=None):
    bf16, f32 = jnp.bfloat16, jnp.float32

    def mm(a, b):
        return jnp.dot(a.astype(bf16), b.astype(bf16), preferred_element_type=f32)

    def bn(h, gb):
        mu = jnp.mean(h, axis=0, keepdims=True)
        var = jnp.mean((h - mu) ** 2, axis=0, keepdims=True)
        return (h - mu) / jnp.sqrt(var + norm_eps) * gb[0:1] + gb[1:2]

    def encoder(h, layers, masks):
        for i, (w, b, gb) in enumerate(layers):
            h = jnp.maximum(bn(mm(h, w) + b, gb), 0.0)
            if masks is not None:
                h = h * masks[i]
        return h

    mz = drop_masks["z"] if drop_masks is not None else None
    ml = drop_masks["l"] if drop_masks is not None else None
    h_z = encoder(x, params["enc_z"], mz)
    z_mean = mm(h_z, params["w_zm"]) + params["b_zm"]
    z_var = jnp.exp(jnp.minimum(mm(h_z, params["w_zv"]) + params["b_zv"], CLIP_MAX))
    z = z_mean + z_var * z_eps
    h_l = encoder(x, params["enc_l"], ml)
    l_mean = mm(h_l, params["w_lm"]) + params["b_lm"]
    l_var = jnp.exp(jnp.minimum(mm(h_l, params["w_lv"]) + params["b_lv"], CLIP_MAX))
    library = l_mean + l_var * l_eps
    yd = bn(mm(z, params["w_d"]), params["gb_d"])
    y = jnp.exp(jnp.minimum(library, CLIP_MAX)) * jax.nn.softmax(yd, axis=-1)
    return z_mean, z_var, z, l_mean, l_var, library, y


def init_params(key, genes_cnt, hidden_dims, hidden_l_dims, latent_dim):
    keys = iter(jax.random.split(key, 64))

    def linear(din, dout):
        w = jax.random.normal(next(keys), (din, dout), jnp.float32) / jnp.sqrt(jnp.float32(din))
        b = 0.01 * jax.random.normal(next(keys), (1, dout), jnp.float32)
        return w, b

    def bn_gb(dim):  # rows: [gamma, beta]
        gamma = 1.0 + 0.1 * jax.random.normal(next(keys), (1, dim), jnp.float32)
        beta = 0.1 * jax.random.normal(next(keys), (1, dim), jnp.float32)
        return jnp.concatenate([gamma, beta], axis=0)

    p = {}
    enc_z, d = [], genes_cnt
    for h in hidden_dims:
        w, b = linear(d, h)
        enc_z.append((w, b, bn_gb(h)))
        d = h
    p["enc_z"] = enc_z
    p["w_zm"], p["b_zm"] = linear(hidden_dims[-1], latent_dim)
    p["w_zv"], p["b_zv"] = linear(hidden_dims[-1], latent_dim)

    enc_l, d = [], genes_cnt
    for h in hidden_l_dims:
        w, b = linear(d, h)
        enc_l.append((w, b, bn_gb(h)))
        d = h
    p["enc_l"] = enc_l
    p["w_lm"], p["b_lm"] = linear(hidden_l_dims[-1], 1)
    p["w_lv"], p["b_lv"] = linear(hidden_l_dims[-1], 1)

    p["w_d"] = jax.random.normal(next(keys), (latent_dim, genes_cnt),
                                 jnp.float32) / jnp.sqrt(jnp.float32(latent_dim))
    p["gb_d"] = bn_gb(genes_cnt)
    # log_theta is only used in loss(), not in forward() -- kept for completeness.
    p["log_theta"] = jax.random.normal(next(keys), (genes_cnt,), jnp.float32)
    return p


if __name__ == "__main__":
    genes_cnt = 256
    hidden_dims = (128, 64)
    hidden_l_dims = (128,)
    latent_dim = 32
    batch = 128            # fills MXU rows
    drop_rate = 0.1
    norm_eps = 0.001

    key = jax.random.PRNGKey(0)
    k_param, k_x, k_zeps, k_leps, k_drop = jax.random.split(key, 5)
    params = init_params(k_param, genes_cnt, hidden_dims, hidden_l_dims, latent_dim)

    x = 5.0 * jax.random.uniform(k_x, (batch, genes_cnt), jnp.float32)   # counts-like
    z_eps = jax.random.normal(k_zeps, (batch, latent_dim), jnp.float32)
    l_eps = jax.random.normal(k_leps, (batch, 1), jnp.float32)

    # 1) dropout-disabled gate (eval-style math) against the pure-JAX reference.
    outs = jax.block_until_ready(
        ldvae_forward(params, x, z_eps, l_eps, norm_eps=norm_eps))
    refs = ldvae_ref(params, x, z_eps, l_eps, norm_eps)
    for got, want in zip(outs, refs):
        np.testing.assert_allclose(np.asarray(got), np.asarray(want),
                                   rtol=1e-2, atol=1e-2)

    # 2) training-mode path: dropout via host-generated keep masks fed to BOTH
    #    the kernel and the reference (full numerical check, not just finiteness).
    keep = 1.0 - drop_rate
    mask_keys = iter(jax.random.split(k_drop, len(hidden_dims) + len(hidden_l_dims)))
    masks_z = [jax.random.bernoulli(next(mask_keys), keep, (batch, d)).astype(jnp.float32) / keep
               for d in hidden_dims]
    masks_l = [jax.random.bernoulli(next(mask_keys), keep, (batch, d)).astype(jnp.float32) / keep
               for d in hidden_l_dims]
    drop_masks = {"z": masks_z, "l": masks_l}

    outs_d = jax.block_until_ready(
        ldvae_forward(params, x, z_eps, l_eps, norm_eps=norm_eps, drop_masks=drop_masks))
    refs_d = ldvae_ref(params, x, z_eps, l_eps, norm_eps, drop_masks=drop_masks)
    for got, want in zip(outs_d, refs_d):
        np.testing.assert_allclose(np.asarray(got), np.asarray(want),
                                   rtol=1e-2, atol=1e-2)

    print("KERNEL_OK")
</pallas_src>

<mosaic_0001>
module attributes {stable_mosaic.version = 11 : i64} {
  func.func @kernel(%arg0: memref<608x256xbf16, #tpu.memory_space<vmem>>, %arg1: memref<32x256xf32, #tpu.memory_space<vmem>>, %arg2: memref<128x289xf32, #tpu.memory_space<vmem>>, %arg3: memref<128x128xf32, #tpu.memory_space<vmem>>, %arg4: memref<128x256xf32, #tpu.memory_space<vmem>>) attributes {dimension_semantics = [], scalar_prefetch = 0 : i64, scratch_operands = 0 : i64, tpu.core_type = #tpu.core_type<tc>} {
    %c0 = arith.constant 0 : index
    %c0_0 = arith.constant 0 : index
    %0 = vector.load %arg2[%c0, %c0_0] : memref<128x289xf32, #tpu.memory_space<vmem>>, vector<128x256xf32>
    %1 = arith.truncf %0 : vector<128x256xf32> to vector<128x256xbf16>
    %c0_1 = arith.constant 0 : index
    %c0_2 = arith.constant 0 : index
    %2 = vector.load %arg0[%c0_1, %c0_2] : memref<608x256xbf16, #tpu.memory_space<vmem>>, vector<256x256xbf16>
    %c0_3 = arith.constant 0 : index
    %c0_4 = arith.constant 0 : index
    %3 = vector.load %arg1[%c0_3, %c0_4] : memref<32x256xf32, #tpu.memory_space<vmem>>, vector<3x256xf32>
    %cst = arith.constant dense<0.000000e+00> : vector<128x256xf32>
    %4 = tpu.matmul %1, %2, %cst {dimension_numbers = #tpu.dot_dimension_numbers<[1], [0], [0], [1], [0, 0, 1, 1], [], []>} : vector<128x256xbf16>, vector<256x256xbf16>, vector<128x256xf32> -> vector<128x256xf32>
    %5 = vector.extract_strided_slice %3 {offsets = [0, 0], sizes = [1, 256], strides = [1, 1]} : vector<3x256xf32> to vector<1x256xf32>
    %6 = vector.broadcast %5 : vector<1x256xf32> to vector<128x256xf32>
    %7 = arith.addf %4, %6 : vector<128x256xf32>
    %8 = vector.extract_strided_slice %3 {offsets = [1, 0], sizes = [1, 256], strides = [1, 1]} : vector<3x256xf32> to vector<1x256xf32>
    %9 = vector.extract_strided_slice %3 {offsets = [2, 0], sizes = [1, 256], strides = [1, 1]} : vector<3x256xf32> to vector<1x256xf32>
    %cst_5 = arith.constant dense<0.000000e+00> : vector<256xf32>
    %10 = vector.multi_reduction <add>, %7, %cst_5 [0] : vector<128x256xf32> to vector<256xf32>
    %11 = vector.shape_cast %10 : vector<256xf32> to vector<1x256xf32>
    %cst_6 = arith.constant 1.280000e+02 : f32
    %12 = vector.broadcast %cst_6 : f32 to vector<1x256xf32>
    %13 = arith.divf %11, %12 : vector<1x256xf32>
    %14 = vector.broadcast %13 : vector<1x256xf32> to vector<128x256xf32>
    %15 = arith.subf %7, %14 : vector<128x256xf32>
    %16 = arith.mulf %15, %15 : vector<128x256xf32>
    %cst_7 = arith.constant dense<0.000000e+00> : vector<256xf32>
    %17 = vector.multi_reduction <add>, %16, %cst_7 [0] : vector<128x256xf32> to vector<256xf32>
    %18 = vector.shape_cast %17 : vector<256xf32> to vector<1x256xf32>
    %cst_8 = arith.constant 1.280000e+02 : f32
    %19 = vector.broadcast %cst_8 : f32 to vector<1x256xf32>
    %20 = arith.divf %18, %19 : vector<1x256xf32>
    %cst_9 = arith.constant 1.000000e-03 : f32
    %21 = vector.broadcast %cst_9 : f32 to vector<1x256xf32>
    %22 = arith.addf %20, %21 : vector<1x256xf32>
    %23 = math.rsqrt %22 : vector<1x256xf32>
    %24 = vector.broadcast %23 : vector<1x256xf32> to vector<128x256xf32>
    %25 = arith.mulf %15, %24 : vector<128x256xf32>
    %26 = vector.broadcast %8 : vector<1x256xf32> to vector<128x256xf32>
    %27 = arith.mulf %25, %26 : vector<128x256xf32>
    %28 = vector.broadcast %9 : vector<1x256xf32> to vector<128x256xf32>
    %29 = arith.addf %27, %28 : vector<128x256xf32>
    %cst_10 = arith.constant 0.000000e+00 : f32
    %30 = vector.broadcast %cst_10 : f32 to vector<128x256xf32>
    %31 = arith.maximumf %29, %30 : vector<128x256xf32>
    %32 = vector.extract_strided_slice %31 {offsets = [0, 0], sizes = [128, 128], strides = [1, 1]} : vector<128x256xf32> to vector<128x128xf32>
    %33 = vector.extract_strided_slice %31 {offsets = [0, 128], sizes = [128, 128], strides = [1, 1]} : vector<128x256xf32> to vector<128x128xf32>
    %c256 = arith.constant 256 : index
    %c0_11 = arith.constant 0 : index
    %34 = vector.load %arg0[%c256, %c0_11] : memref<608x256xbf16, #tpu.memory_space<vmem>>, vector<128x64xbf16>
    %c8 = arith.constant 8 : index
    %c0_12 = arith.constant 0 : index
    %35 = vector.load %arg1[%c8, %c0_12] : memref<32x256xf32, #tpu.memory_space<vmem>>, vector<3x64xf32>
    %36 = arith.truncf %32 : vector<128x128xf32> to vector<128x128xbf16>
    %cst_13 = arith.constant dense<0.000000e+00> : vector<128x64xf32>
    %37 = tpu.matmul %36, %34, %cst_13 {dimension_numbers = #tpu.dot_dimension_numbers<[1], [0], [0], [1], [0, 0, 1, 1], [], []>} : vector<128x128xbf16>, vector<128x64xbf16>, vector<128x64xf32> -> vector<128x64xf32>
    %38 = vector.extract_strided_slice %35 {offsets = [0, 0], sizes = [1, 64], strides = [1, 1]} : vector<3x64xf32> to vector<1x64xf32>
    %39 = vector.broadcast %38 : vector<1x64xf32> to vector<128x64xf32>
    %40 = arith.addf %37, %39 : vector<128x64xf32>
    %41 = vector.extract_strided_slice %35 {offsets = [1, 0], sizes = [1, 64], strides = [1, 1]} : vector<3x64xf32> to vector<1x64xf32>
    %42 = vector.extract_strided_slice %35 {offsets = [2, 0], sizes = [1, 64], strides = [1, 1]} : vector<3x64xf32> to vector<1x64xf32>
    %cst_14 = arith.constant dense<0.000000e+00> : vector<64xf32>
    %43 = vector.multi_reduction <add>, %40, %cst_14 [0] : vector<128x64xf32> to vector<64xf32>
    %44 = vector.shape_cast %43 : vector<64xf32> to vector<1x64xf32>
    %cst_15 = arith.constant 1.280000e+02 : f32
    %45 = vector.broadcast %cst_15 : f32 to vector<1x64xf32>
    %46 = arith.divf %44, %45 : vector<1x64xf32>
    %47 = vector.broadcast %46 : vector<1x64xf32> to vector<128x64xf32>
    %48 = arith.subf %40, %47 : vector<128x64xf32>
    %49 = arith.mulf %48, %48 : vector<128x64xf32>
    %cst_16 = arith.constant dense<0.000000e+00> : vector<64xf32>
    %50 = vector.multi_reduction <add>, %49, %cst_16 [0] : vector<128x64xf32> to vector<64xf32>
    %51 = vector.shape_cast %50 : vector<64xf32> to vector<1x64xf32>
    %cst_17 = arith.constant 1.280000e+02 : f32
    %52 = vector.broadcast %cst_17 : f32 to vector<1x64xf32>
    %53 = arith.divf %51, %52 : vector<1x64xf32>
    %cst_18 = arith.constant 1.000000e-03 : f32
    %54 = vector.broadcast %cst_18 : f32 to vector<1x64xf32>
    %55 = arith.addf %53, %54 : vector<1x64xf32>
    %56 = math.rsqrt %55 : vector<1x64xf32>
    %57 = vector.broadcast %56 : vector<1x64xf32> to vector<128x64xf32>
    %58 = arith.mulf %48, %57 : vector<128x64xf32>
    %59 = vector.broadcast %41 : vector<1x64xf32> to vector<128x64xf32>
    %60 = arith.mulf %58, %59 : vector<128x64xf32>
    %61 = vector.broadcast %42 : vector<1x64xf32> to vector<128x64xf32>
    %62 = arith.addf %60, %61 : vector<128x64xf32>
    %cst_19 = arith.constant 0.000000e+00 : f32
    %63 = vector.broadcast %cst_19 : f32 to vector<128x64xf32>
    %64 = arith.maximumf %62, %63 : vector<128x64xf32>
    %c384 = arith.constant 384 : index
    %c0_20 = arith.constant 0 : index
    %65 = vector.load %arg0[%c384, %c0_20] : memref<608x256xbf16, #tpu.memory_space<vmem>>, vector<192x66xbf16>
    %c16 = arith.constant 16 : index
    %c0_21 = arith.constant 0 : index
    %66 = vector.load %arg1[%c16, %c0_21] : memref<32x256xf32, #tpu.memory_space<vmem>>, vector<1x66xf32>
    %67 = tpu.concatenate %64, %33 in 1 : vector<128x64xf32>, vector<128x128xf32> -> vector<128x192xf32>
    %68 = arith.truncf %67 : vector<128x192xf32> to vector<128x192xbf16>
    %cst_22 = arith.constant dense<0.000000e+00> : vector<128x66xf32>
    %69 = tpu.matmul %68, %65, %cst_22 {dimension_numbers = #tpu.dot_dimension_numbers<[1], [0], [0], [1], [0, 0, 1, 1], [], []>} : vector<128x192xbf16>, vector<192x66xbf16>, vector<128x66xf32> -> vector<128x66xf32>
    %70 = vector.broadcast %66 : vector<1x66xf32> to vector<128x66xf32>
    %71 = arith.addf %69, %70 : vector<128x66xf32>
    %72 = vector.extract_strided_slice %71 {offsets = [0, 0], sizes = [128, 32], strides = [1, 1]} : vector<128x66xf32> to vector<128x32xf32>
    %73 = vector.extract_strided_slice %71 {offsets = [0, 32], sizes = [128, 32], strides = [1, 1]} : vector<128x66xf32> to vector<128x32xf32>
    %cst_23 = arith.constant 1.000000e+01 : f32
    %74 = vector.broadcast %cst_23 : f32 to vector<128x32xf32>
    %75 = arith.minimumf %73, %74 : vector<128x32xf32>
    %76 = math.exp %75 : vector<128x32xf32>
    %77 = vector.extract_strided_slice %71 {offsets = [0, 64], sizes = [128, 1], strides = [1, 1]} : vector<128x66xf32> to vector<128x1xf32>
    %78 = vector.extract_strided_slice %71 {offsets = [0, 65], sizes = [128, 1], strides = [1, 1]} : vector<128x66xf32> to vector<128x1xf32>
    %cst_24 = arith.constant 1.000000e+01 : f32
    %79 = vector.broadcast %cst_24 : f32 to vector<128x1xf32>
    %80 = arith.minimumf %78, %79 : vector<128x1xf32>
    %81 = math.exp %80 : vector<128x1xf32>
    %c0_25 = arith.constant 0 : index
    %c256_26 = arith.constant 256 : index
    %82 = vector.load %arg2[%c0_25, %c256_26] : memref<128x289xf32, #tpu.memory_space<vmem>>, vector<128x32xf32>
    %c0_27 = arith.constant 0 : index
    %c288 = arith.constant 288 : index
    %83 = vector.load %arg2[%c0_27, %c288] : memref<128x289xf32, #tpu.memory_space<vmem>>, vector<128x1xf32>
    %84 = arith.mulf %76, %82 : vector<128x32xf32>
    %85 = arith.addf %72, %84 : vector<128x32xf32>
    %86 = arith.mulf %81, %83 : vector<128x1xf32>
    %87 = arith.addf %77, %86 : vector<128x1xf32>
    %c576 = arith.constant 576 : index
    %c0_28 = arith.constant 0 : index
    %88 = vector.load %arg0[%c576, %c0_28] : memref<608x256xbf16, #tpu.memory_space<vmem>>, vector<32x256xbf16>
    %c24 = arith.constant 24 : index
    %c0_29 = arith.constant 0 : index
    %89 = vector.load %arg1[%c24, %c0_29] : memref<32x256xf32, #tpu.memory_space<vmem>>, vector<2x256xf32>
    %90 = arith.truncf %85 : vector<128x32xf32> to vector<128x32xbf16>
    %cst_30 = arith.constant dense<0.000000e+00> : vector<128x256xf32>
    %91 = tpu.matmul %90, %88, %cst_30 {dimension_numbers = #tpu.dot_dimension_numbers<[1], [0], [0], [1], [0, 0, 1, 1], [], []>} : vector<128x32xbf16>, vector<32x256xbf16>, vector<128x256xf32> -> vector<128x256xf32>
    %92 = vector.extract_strided_slice %89 {offsets = [0, 0], sizes = [1, 256], strides = [1, 1]} : vector<2x256xf32> to vector<1x256xf32>
    %93 = vector.extract_strided_slice %89 {offsets = [1, 0], sizes = [1, 256], strides = [1, 1]} : vector<2x256xf32> to vector<1x256xf32>
    %cst_31 = arith.constant dense<0.000000e+00> : vector<256xf32>
    %94 = vector.multi_reduction <add>, %91, %cst_31 [0] : vector<128x256xf32> to vector<256xf32>
    %95 = vector.shape_cast %94 : vector<256xf32> to vector<1x256xf32>
    %cst_32 = arith.constant 1.280000e+02 : f32
    %96 = vector.broadcast %cst_32 : f32 to vector<1x256xf32>
    %97 = arith.divf %95, %96 : vector<1x256xf32>
    %98 = vector.broadcast %97 : vector<1x256xf32> to vector<128x256xf32>
    %99 = arith.subf %91, %98 : vector<128x256xf32>
    %100 = arith.mulf %99, %99 : vector<128x256xf32>
    %cst_33 = arith.constant dense<0.000000e+00> : vector<256xf32>
    %101 = vector.multi_reduction <add>, %100, %cst_33 [0] : vector<128x256xf32> to vector<256xf32>
    %102 = vector.shape_cast %101 : vector<256xf32> to vector<1x256xf32>
    %cst_34 = arith.constant 1.280000e+02 : f32
    %103 = vector.broadcast %cst_34 : f32 to vector<1x256xf32>
    %104 = arith.divf %102, %103 : vector<1x256xf32>
    %cst_35 = arith.constant 1.000000e-03 : f32
    %105 = vector.broadcast %cst_35 : f32 to vector<1x256xf32>
    %106 = arith.addf %104, %105 : vector<1x256xf32>
    %107 = math.rsqrt %106 : vector<1x256xf32>
    %108 = vector.broadcast %107 : vector<1x256xf32> to vector<128x256xf32>
    %109 = arith.mulf %99, %108 : vector<128x256xf32>
    %110 = vector.broadcast %92 : vector<1x256xf32> to vector<128x256xf32>
    %111 = arith.mulf %109, %110 : vector<128x256xf32>
    %112 = vector.broadcast %93 : vector<1x256xf32> to vector<128x256xf32>
    %113 = arith.addf %111, %112 : vector<128x256xf32>
    %cst_36 = arith.constant dense<0xFF800000> : vector<128xf32>
    %114 = vector.multi_reduction <maximumf>, %113, %cst_36 [1] : vector<128x256xf32> to vector<128xf32>
    %115 = vector.shape_cast %114 : vector<128xf32> to vector<128x1xf32>
    %116 = vector.broadcast %115 : vector<128x1xf32> to vector<128x256xf32>
    %117 = arith.subf %113, %116 : vector<128x256xf32>
    %118 = math.exp %117 : vector<128x256xf32>
    %cst_37 = arith.constant dense<0.000000e+00> : vector<128xf32>
    %119 = vector.multi_reduction <add>, %118, %cst_37 [1] : vector<128x256xf32> to vector<128xf32>
    %120 = vector.shape_cast %119 : vector<128xf32> to vector<128x1xf32>
    %121 = tpu.reciprocal %120 {approx = true} : vector<128x1xf32> -> vector<128x1xf32>
    %122 = arith.mulf %120, %121 : vector<128x1xf32>
    %cst_38 = arith.constant 2.000000e+00 : f32
    %123 = vector.broadcast %cst_38 : f32 to vector<128x1xf32>
    %124 = arith.subf %123, %122 : vector<128x1xf32>
    %125 = arith.mulf %121, %124 : vector<128x1xf32>
    %126 = vector.broadcast %125 : vector<128x1xf32> to vector<128x256xf32>
    %127 = arith.mulf %118, %126 : vector<128x256xf32>
    %cst_39 = arith.constant 1.000000e+01 : f32
    %128 = vector.broadcast %cst_39 : f32 to vector<128x1xf32>
    %129 = arith.minimumf %87, %128 : vector<128x1xf32>
    %130 = math.exp %129 : vector<128x1xf32>
    %131 = vector.broadcast %130 : vector<128x1xf32> to vector<128x256xf32>
    %132 = arith.mulf %131, %127 : vector<128x256xf32>
    %cst_40 = arith.constant 0.000000e+00 : f32
    %133 = vector.broadcast %cst_40 : f32 to vector<128x29xf32>
    %134 = tpu.concatenate %72, %76, %85, %77, %81, %87, %133 in 1 : vector<128x32xf32>, vector<128x32xf32>, vector<128x32xf32>, vector<128x1xf32>, vector<128x1xf32>, vector<128x1xf32>, vector<128x29xf32> -> vector<128x128xf32>
    %c0_41 = arith.constant 0 : index
    %c0_42 = arith.constant 0 : index
    %135 = vector.load %arg3[%c0_41, %c0_42] : memref<128x128xf32, #tpu.memory_space<vmem>>, vector<128x128xf32>
    tpu.vector_store %arg3[%c0_41, %c0_42], %134 {strides = array<i32>} : memref<128x128xf32, #tpu.memory_space<vmem>>, vector<128x128xf32>,
    %c0_43 = arith.constant 0 : index
    %c0_44 = arith.constant 0 : index
    %136 = vector.load %arg4[%c0_43, %c0_44] : memref<128x256xf32, #tpu.memory_space<vmem>>, vector<128x256xf32>
    tpu.vector_store %arg4[%c0_43, %c0_44], %132 {strides = array<i32>} : memref<128x256xf32, #tpu.memory_space<vmem>>, vector<128x256xf32>,
    return
  }
}

</mosaic_0001>

<llo_original>
// kernel: tpu_custom_call.1
$region0: #{tpu_custom_call.1}
  #allocation0 [shape = 'u32[]', space=smem, size = 0x4, offset = 0x4, fixed_abs, tag = 'smem constant byte address 0x4 - core index']
  #allocation1 [shape = 'u32[144,128]{1,0:T(1,128)}', space=vmem, size = 0x12000, scoped, tag = 'internal scratch']
  %s0 = inlined_call_operand.vmem [shape: bf16[608,256], index: 0, kind: input, shape index: {}]
  %s1 = inlined_call_operand.vmem [shape: f32[32,256], index: 1, kind: input, shape index: {}]
  %s2 = inlined_call_operand.vmem [shape: f32[128,289], index: 2, kind: input, shape index: {}]
  %s3 = inlined_call_operand.hbm [shape: f32[128,128], index: 3, kind: output, shape index: {0}]
  %s4 = inlined_call_operand.hbm [shape: f32[128,256], index: 4, kind: output, shape index: {1}]
  %5 = xla_tuple %s3, %s4
  %s6 = sld [smem:[#allocation0]]
  $region30: #{tpu_custom_call.1} parent=0
    _
  %s8 = ssub.s32 1, %s6
  %s9 = scalar_select 0, %s8, %s6
  $region1: #{tpu_custom_call.1} parent=0
    #allocation2 [shape = 'u8[65536]{0}', space=vmem, size = 0x10000, scoped, tag = 'output window, operand 0, single buffered']
    #allocation3 [shape = 's32[1]{0}', space=sflag, size = 0x4, scoped, tag = 'scoped memory for tpu_custom_call.1']
    #allocation4 [shape = 'u8[131072]{0}', space=vmem, size = 0x20000, scoped, tag = 'output window, operand 1, single buffered']
    #allocation5 [shape = 's32[1]{0}', space=sflag, size = 0x4, scoped, tag = 'scoped memory for tpu_custom_call.1']
    %10 = vsyncpa [#allocation3], 0
    %11 = vsyncpa [#allocation5], 0
    // Predicated region
    $region2: #{tpu_custom_call.1} parent=1 // pred_check
      _
    $region3: #{tpu_custom_call.1} parent=1 // pred_check_branch
      %13 = sbr.rel (0) target = $region5
    $region4: #{tpu_custom_call.1} parent=1 // pred_region
      _
    $region5: #{tpu_custom_call.1} parent=1 // pred_fallthru
      _
    // Predicated region
    $region6: #{tpu_custom_call.1} parent=1 // pred_check
      _
    $region7: #{tpu_custom_call.1} parent=1 // pred_check_branch
      %15 = sbr.rel (0) target = $region9
    $region8: #{tpu_custom_call.1} parent=1 // pred_region
      _
    $region9: #{tpu_custom_call.1} parent=1 // pred_fallthru
      _
    // Predicated region
    $region10: #{tpu_custom_call.1} parent=1 // pred_check
      _
    $region11: #{tpu_custom_call.1} parent=1 // pred_check_branch
      %17 = sbr.rel (0) target = $region13
    $region12: #{tpu_custom_call.1} parent=1 // pred_region
      _
    $region13: #{tpu_custom_call.1} parent=1 // pred_fallthru
      _
    %v19 = vld [vmem:[%s2] sm:$0xff]
    %v20 = vld [vmem:[%s2 + $0x8] sm:$0xff]
    %v21 = vld [vmem:[%s2 + $0x18] sm:$0xff]
    %v22 = vld [vmem:[%s2 + $0x20] sm:$0xff]
    %v23 = vld [vmem:[%s2 + $0x30] sm:$0xff]
    %v24 = vld [vmem:[%s2 + $0x38] sm:$0xff]
    %v25 = vld [vmem:[%s2 + $0x48] sm:$0xff]
    %v26 = vld [vmem:[%s2 + $0x50] sm:$0xff]
    %v27 = vld [vmem:[%s2 + $0x60] sm:$0xff]
    %v28 = vld [vmem:[%s2 + $0x68] sm:$0xff]
    %v29 = vld [vmem:[%s2 + $0x78] sm:$0xff]
    %v30 = vld [vmem:[%s2 + $0x80] sm:$0xff]
    %v31 = vld [vmem:[%s2 + $0x90] sm:$0xff]
    %v32 = vld [vmem:[%s2 + $0x98] sm:$0xff]
    %v33 = vld [vmem:[%s2 + $0xa8] sm:$0xff]
    %v34 = vld [vmem:[%s2 + $0xb0] sm:$0xff]
    %v35 = vld [vmem:[%s2 + $0xc0] sm:$0xff]
    %v36 = vld [vmem:[%s2 + $0xc8] sm:$0xff]
    %v37 = vld [vmem:[%s2 + $0xd8] sm:$0xff]
    %v38 = vld [vmem:[%s2 + $0xe0] sm:$0xff]
    %v39 = vld [vmem:[%s2 + $0xf0] sm:$0xff]
    %v40 = vld [vmem:[%s2 + $0xf8] sm:$0xff]
    %v41 = vld [vmem:[%s2 + $0x108] sm:$0xff]
    %v42 = vld [vmem:[%s2 + $0x110] sm:$0xff]
    %v43 = vld [vmem:[%s2 + $0x120] sm:$0xff]
    %v44 = vld [vmem:[%s2 + $0x128] sm:$0xff]
    %v45 = vld [vmem:[%s2 + $0x138] sm:$0xff]
    %v46 = vld [vmem:[%s2 + $0x140] sm:$0xff]
    %v47 = vld [vmem:[%s2 + $0x150] sm:$0xff]
    %v48 = vld [vmem:[%s2 + $0x158] sm:$0xff]
    %v49 = vld [vmem:[%s2 + $0x168] sm:$0xff]
    %v50 = vld [vmem:[%s2 + $0x170] sm:$0xff]
    %v51 = vpack.c.bf16 %v21, %v19
    %v52 = vpack.c.bf16 %v22, %v20
    %v53 = vpack.c.bf16 %v25, %v23
    %v54 = vpack.c.bf16 %v26, %v24
    %v55 = vpack.c.bf16 %v29, %v27
    %v56 = vpack.c.bf16 %v30, %v28
    %v57 = vpack.c.bf16 %v33, %v31
    %v58 = vpack.c.bf16 %v34, %v32
    %v59 = vpack.c.bf16 %v37, %v35
    %v60 = vpack.c.bf16 %v38, %v36
    %v61 = vpack.c.bf16 %v41, %v39
    %v62 = vpack.c.bf16 %v42, %v40
    %v63 = vpack.c.bf16 %v45, %v43
    %v64 = vpack.c.bf16 %v46, %v44
    %v65 = vpack.c.bf16 %v49, %v47
    %v66 = vpack.c.bf16 %v50, %v48
    %v67 = vld [vmem:[%s0] sm:$0xff]
    %v68 = vld [vmem:[%s0 + $0x8] sm:$0xff]
    %v69 = vld [vmem:[%s0 + $0x10] sm:$0xff]
    %v70 = vld [vmem:[%s0 + $0x18] sm:$0xff]
    %v71 = vld [vmem:[%s0 + $0x20] sm:$0xff]
    %v72 = vld [vmem:[%s0 + $0x28] sm:$0xff]
    %v73 = vld [vmem:[%s0 + $0x30] sm:$0xff]
    %v74 = vld [vmem:[%s0 + $0x38] sm:$0xff]
    %v75 = vld [vmem:[%s0 + $0x40] sm:$0xff]
    %v76 = vld [vmem:[%s0 + $0x48] sm:$0xff]
    %v77 = vld [vmem:[%s0 + $0x50] sm:$0xff]
    %v78 = vld [vmem:[%s0 + $0x58] sm:$0xff]
    %v79 = vld [vmem:[%s0 + $0x60] sm:$0xff]
    %v80 = vld [vmem:[%s0 + $0x68] sm:$0xff]
    %v81 = vld [vmem:[%s0 + $0x70] sm:$0xff]
    %v82 = vld [vmem:[%s0 + $0x78] sm:$0xff]
    %v83 = vld [vmem:[%s0 + $0x80] sm:$0xff]
    %v84 = vld [vmem:[%s0 + $0x88] sm:$0xff]
    %v85 = vld [vmem:[%s0 + $0x90] sm:$0xff]
    %v86 = vld [vmem:[%s0 + $0x98] sm:$0xff]
    %v87 = vld [vmem:[%s0 + $0xa0] sm:$0xff]
    %v88 = vld [vmem:[%s0 + $0xa8] sm:$0xff]
    %v89 = vld [vmem:[%s0 + $0xb0] sm:$0xff]
    %v90 = vld [vmem:[%s0 + $0xb8] sm:$0xff]
    %v91 = vld [vmem:[%s0 + $0xc0] sm:$0xff]
    %v92 = vld [vmem:[%s0 + $0xc8] sm:$0xff]
    %v93 = vld [vmem:[%s0 + $0xd0] sm:$0xff]
    %v94 = vld [vmem:[%s0 + $0xd8] sm:$0xff]
    %v95 = vld [vmem:[%s0 + $0xe0] sm:$0xff]
    %v96 = vld [vmem:[%s0 + $0xe8] sm:$0xff]
    %v97 = vld [vmem:[%s0 + $0xf0] sm:$0xff]
    %v98 = vld [vmem:[%s0 + $0xf8] sm:$0xff]
    %v99 = vld [vmem:[%s1] sm:$0x7]
    %v100 = vld [vmem:[%s1 + $0x8] sm:$0x7]
    %v101 = vlaneseq
    %v102 = vshrl.u32 %v101, 7
    %v103 = vsub.s32 0, %v102
    %v104 = vrot.slane %v99, %v103
    %v105 = vlaneseq
    %v106 = vshrl.u32 %v105, 7
    %v107 = vsub.s32 0, %v106
    %v108 = vrot.slane %v100, %v107
    %v141 = vunpack.c.l.b16 %v67
    %v142 = vunpack.c.h.b16 %v67
    %v143 = vunpack.c.l.b16 %v68
    %v144 = vunpack.c.h.b16 %v68
    %v145 = vunpack.c.l.b16 %v69
    %v146 = vunpack.c.h.b16 %v69
    %v147 = vunpack.c.l.b16 %v70
    %v148 = vunpack.c.h.b16 %v70
    %v149 = vunpack.c.l.b16 %v71
    %v150 = vunpack.c.h.b16 %v71
    %v151 = vunpack.c.l.b16 %v72
    %v152 = vunpack.c.h.b16 %v72
    %v153 = vunpack.c.l.b16 %v73
    %v154 = vunpack.c.h.b16 %v73
    %v155 = vunpack.c.l.b16 %v74
    %v156 = vunpack.c.h.b16 %v74
    %v157 = vunpack.c.l.b16 %v75
    %v158 = vunpack.c.h.b16 %v75
    %v159 = vunpack.c.l.b16 %v76
    %v160 = vunpack.c.h.b16 %v76
    %v161 = vunpack.c.l.b16 %v77
    %v162 = vunpack.c.h.b16 %v77
    %v163 = vunpack.c.l.b16 %v78
    %v164 = vunpack.c.h.b16 %v78
    %v165 = vunpack.c.l.b16 %v79
    %v166 = vunpack.c.h.b16 %v79
    %v167 = vunpack.c.l.b16 %v80
    %v168 = vunpack.c.h.b16 %v80
    %v169 = vunpack.c.l.b16 %v81
    %v170 = vunpack.c.h.b16 %v81
    %v171 = vunpack.c.l.b16 %v82
    %v172 = vunpack.c.h.b16 %v82
    %v173 = vunpack.c.l.b16 %v83
    %v174 = vunpack.c.h.b16 %v83
    %v175 = vunpack.c.l.b16 %v84
    %v176 = vunpack.c.h.b16 %v84
    %v177 = vunpack.c.l.b16 %v85
    %v178 = vunpack.c.h.b16 %v85
    %v179 = vunpack.c.l.b16 %v86
    %v180 = vunpack.c.h.b16 %v86
    %v181 = vunpack.c.l.b16 %v87
    %v182 = vunpack.c.h.b16 %v87
    %v183 = vunpack.c.l.b16 %v88
    %v184 = vunpack.c.h.b16 %v88
    %v185 = vunpack.c.l.b16 %v89
    %v186 = vunpack.c.h.b16 %v89
    %v187 = vunpack.c.l.b16 %v90
    %v188 = vunpack.c.h.b16 %v90
    %v189 = vunpack.c.l.b16 %v91
    %v190 = vunpack.c.h.b16 %v91
    %v191 = vunpack.c.l.b16 %v92
    %v192 = vunpack.c.h.b16 %v92
    %v193 = vunpack.c.l.b16 %v93
    %v194 = vunpack.c.h.b16 %v93
    %v195 = vunpack.c.l.b16 %v94
    %v196 = vunpack.c.h.b16 %v94
    %v197 = vunpack.c.l.b16 %v95
    %v198 = vunpack.c.h.b16 %v95
    %v199 = vunpack.c.l.b16 %v96
    %v200 = vunpack.c.h.b16 %v96
    %v201 = vunpack.c.l.b16 %v97
    %v202 = vunpack.c.h.b16 %v97
    %v203 = vunpack.c.l.b16 %v98
    %v204 = vunpack.c.h.b16 %v98
    %v205 = vpack.c.b16 %v143, %v141
    %v206 = vpack.c.b16 %v144, %v142
    %v207 = vpack.c.b16 %v147, %v145
    %v208 = vpack.c.b16 %v148, %v146
    %v209 = vpack.c.b16 %v151, %v149
    %v210 = vpack.c.b16 %v152, %v150
    %v211 = vpack.c.b16 %v155, %v153
    %v212 = vpack.c.b16 %v156, %v154
    %v213 = vpack.c.b16 %v159, %v157
    %v214 = vpack.c.b16 %v160, %v158
    %v215 = vpack.c.b16 %v163, %v161
    %v216 = vpack.c.b16 %v164, %v162
    %v217 = vpack.c.b16 %v167, %v165
    %v218 = vpack.c.b16 %v168, %v166
    %v219 = vpack.c.b16 %v171, %v169
    %v220 = vpack.c.b16 %v172, %v170
    %v221 = vpack.c.b16 %v175, %v173
    %v222 = vpack.c.b16 %v176, %v174
    %v223 = vpack.c.b16 %v179, %v177
    %v224 = vpack.c.b16 %v180, %v178
    %v225 = vpack.c.b16 %v183, %v181
    %v226 = vpack.c.b16 %v184, %v182
    %v227 = vpack.c.b16 %v187, %v185
    %v228 = vpack.c.b16 %v188, %v186
    %v229 = vpack.c.b16 %v191, %v189
    %v230 = vpack.c.b16 %v192, %v190
    %v231 = vpack.c.b16 %v195, %v193
    %v232 = vpack.c.b16 %v196, %v194
    %v233 = vpack.c.b16 %v199, %v197
    %v234 = vpack.c.b16 %v200, %v198
    %v235 = vpack.c.b16 %v203, %v201
    %v236 = vpack.c.b16 %v204, %v202
    %269 = vmatprep.subr.bf16.mxu0 %v220
    %270 = vmatpush1.bf16.msra.mxu0 %v219
    %271 = vmatprep.subr.bf16.mxu0 %v218
    %272 = vmatpush1.bf16.msra.mxu0 %v217
    %273 = vmatprep.subr.bf16.mxu0 %v216
    %274 = vmatpush1.bf16.msra.mxu0 %v215
    %275 = vmatprep.subr.bf16.mxu0 %v214
    %276 = vmatpush1.bf16.msra.mxu0 %v213
    %277 = vmatprep.subr.bf16.mxu0 %v212
    %278 = vmatpush1.bf16.msra.mxu0 %v211
    %279 = vmatprep.subr.bf16.mxu0 %v210
    %280 = vmatpush1.bf16.msra.mxu0 %v209
    %281 = vmatprep.subr.bf16.mxu0 %v208
    %282 = vmatpush1.bf16.msra.mxu0 %v207
    %283 = vmatprep.subr.bf16.mxu0 %v206
    %284 = vmatpush1.bf16.msra.mxu0 %v205
    %285 = vmatprep.subr.bf16.mxu0 %v236
    %286 = vmatpush2.bf16.msra.mxu0 %v235
    %287 = vmatprep.subr.bf16.mxu0 %v234
    %288 = vmatpush2.bf16.msra.mxu0 %v233
    %289 = vmatprep.subr.bf16.mxu0 %v232
    %290 = vmatpush2.bf16.msra.mxu0 %v231
    %291 = vmatprep.subr.bf16.mxu0 %v230
    %292 = vmatpush2.bf16.msra.mxu0 %v229
    %293 = vmatprep.subr.bf16.mxu0 %v228
    %294 = vmatpush2.bf16.msra.mxu0 %v227
    %295 = vmatprep.subr.bf16.mxu0 %v226
    %296 = vmatpush2.bf16.msra.mxu0 %v225
    %297 = vmatprep.subr.bf16.mxu0 %v224
    %298 = vmatpush2.bf16.msra.mxu0 %v223
    %299 = vmatprep.subr.bf16.mxu0 %v222
    %300 = vmatpush2.bf16.msra.mxu0 %v221
    %301 = vmatprep.mubr.bf16.mxu0 %v52
    %302 = vmatmul.mubr.bf16.gmra.mxu0 %v51
    %v303 = vpop.f32.mrf.mxu0
    %v304 = vadd.f32 %v104, %v303
    %v305 = vpop.f32.mrf.mxu0
    %v306 = vadd.f32 %v108, %v305
    %v307 = vpop.f32.mrf.mxu0
    %v308 = vadd.f32 %v104, %v307
    %v309 = vpop.f32.mrf.mxu0
    %v310 = vadd.f32 %v108, %v309
    %311 = vmatprep.mubr.bf16.mxu0 %v54
    %312 = vmatmul.mubr.bf16.gmra.mxu0 %v53
    %v313 = vpop.f32.mrf.mxu0
    %v314 = vadd.f32 %v104, %v313
    %v315 = vpop.f32.mrf.mxu0
    %v316 = vadd.f32 %v108, %v315
    %v317 = vpop.f32.mrf.mxu0
    %v318 = vadd.f32 %v104, %v317
    %v319 = vpop.f32.mrf.mxu0
    %v320 = vadd.f32 %v108, %v319
    %321 = vmatprep.mubr.bf16.mxu0 %v56
    %322 = vmatmul.mubr.bf16.gmra.mxu0 %v55
    %v323 = vpop.f32.mrf.mxu0
    %v324 = vadd.f32 %v104, %v323
    %v325 = vpop.f32.mrf.mxu0
    %v326 = vadd.f32 %v108, %v325
    %v327 = vpop.f32.mrf.mxu0
    %v328 = vadd.f32 %v104, %v327
    %v329 = vpop.f32.mrf.mxu0
    %v330 = vadd.f32 %v108, %v329
    %331 = vmatprep.mubr.bf16.mxu0 %v58
    %332 = vmatmul.mubr.bf16.gmra.mxu0 %v57
    %v333 = vpop.f32.mrf.mxu0
    %v334 = vadd.f32 %v104, %v333
    %v335 = vpop.f32.mrf.mxu0
    %v336 = vadd.f32 %v108, %v335
    %v337 = vpop.f32.mrf.mxu0
    %v338 = vadd.f32 %v104, %v337
    %v339 = vpop.f32.mrf.mxu0
    %v340 = vadd.f32 %v108, %v339
    %341 = vmatprep.mubr.bf16.mxu0 %v60
    %342 = vmatmul.mubr.bf16.gmra.mxu0 %v59
    %v343 = vpop.f32.mrf.mxu0
    %v344 = vadd.f32 %v104, %v343
    %v345 = vpop.f32.mrf.mxu0
    %v346 = vadd.f32 %v108, %v345
    %v347 = vpop.f32.mrf.mxu0
    %v348 = vadd.f32 %v104, %v347
    %v349 = vpop.f32.mrf.mxu0
    %v350 = vadd.f32 %v108, %v349
    %351 = vmatprep.mubr.bf16.mxu0 %v62
    %352 = vmatmul.mubr.bf16.gmra.mxu0 %v61
    %v353 = vpop.f32.mrf.mxu0
    %v354 = vadd.f32 %v104, %v353
    %v355 = vpop.f32.mrf.mxu0
    %v356 = vadd.f32 %v108, %v355
    %v357 = vpop.f32.mrf.mxu0
    %v358 = vadd.f32 %v104, %v357
    %v359 = vpop.f32.mrf.mxu0
    %v360 = vadd.f32 %v108, %v359
    %361 = vmatprep.mubr.bf16.mxu0 %v64
    %362 = vmatmul.mubr.bf16.gmra.mxu0 %v63
    %v363 = vpop.f32.mrf.mxu0
    %v364 = vadd.f32 %v104, %v363
    %v365 = vpop.f32.mrf.mxu0
    %v366 = vadd.f32 %v108, %v365
    %v367 = vpop.f32.mrf.mxu0
    %v368 = vadd.f32 %v104, %v367
    %v369 = vpop.f32.mrf.mxu0
    %v370 = vadd.f32 %v108, %v369
    %371 = vmatprep.mubr.bf16.mxu0 %v66
    %372 = vmatmul.mubr.bf16.gmra.mxu0 %v65
    %v373 = vpop.f32.mrf.mxu0
    %v374 = vadd.f32 %v104, %v373
    %v375 = vpop.f32.mrf.mxu0
    %v376 = vadd.f32 %v108, %v375
    %v377 = vpop.f32.mrf.mxu0
    %v378 = vadd.f32 %v104, %v377
    %v379 = vpop.f32.mrf.mxu0
    %v380 = vadd.f32 %v108, %v379
    %381 = vdwg.mxu0
    %v382 = vadd.f32 %v304, %v308
    %v383 = vadd.f32 %v382, %v314
    %v384 = vadd.f32 %v383, %v318
    %v385 = vadd.f32 %v384, %v324
    %v386 = vadd.f32 %v385, %v328
    %v387 = vadd.f32 %v386, %v334
    %v388 = vadd.f32 %v387, %v338
    %v389 = vadd.f32 %v388, %v344
    %v390 = vadd.f32 %v389, %v348
    %v391 = vadd.f32 %v390, %v354
    %v392 = vadd.f32 %v391, %v358
    %v393 = vadd.f32 %v392, %v364
    %v394 = vadd.f32 %v393, %v368
    %v395 = vadd.f32 %v394, %v374
    %v396 = vadd.f32 %v395, %v378
    %v397 = vrot.slane %v396, 4
    %v398 = vadd.f32 %v396, %v397
    %v399 = vrot.slane %v398, 2
    %v400 = vadd.f32 %v398, %v399
    %v401 = vrot.slane %v400, 1
    %v402 = vadd.f32 %v400, %v401
    %v403 = vadd.f32 %v306, %v310
    %v404 = vadd.f32 %v403, %v316
    %v405 = vadd.f32 %v404, %v320
    %v406 = vadd.f32 %v405, %v326
    %v407 = vadd.f32 %v406, %v330
    %v408 = vadd.f32 %v407, %v336
    %v409 = vadd.f32 %v408, %v340
    %v410 = vadd.f32 %v409, %v346
    %v411 = vadd.f32 %v410, %v350
    %v412 = vadd.f32 %v411, %v356
    %v413 = vadd.f32 %v412, %v360
    %v414 = vadd.f32 %v413, %v366
    %v415 = vadd.f32 %v414, %v370
    %v416 = vadd.f32 %v415, %v376
    %v417 = vadd.f32 %v416, %v380
    %v418 = vrot.slane %v417, 4
    %v419 = vadd.f32 %v417, %v418
    %v420 = vrot.slane %v419, 2
    %v421 = vadd.f32 %v419, %v420
    %v422 = vrot.slane %v421, 1
    %v423 = vadd.f32 %v421, %v422
    %v424 = vrcp.pop 128.0
    %v425 = vmul.f32 %v402, %v424
    %v426 = vmul.f32 %v423, %v424
    %v427 = vsub.f32 %v304, %v425
    %v428 = vsub.f32 %v306, %v426
    %v429 = vsub.f32 %v308, %v425
    %v430 = vsub.f32 %v310, %v426
    %v431 = vsub.f32 %v314, %v425
    %v432 = vsub.f32 %v316, %v426
    %v433 = vsub.f32 %v318, %v425
    %v434 = vsub.f32 %v320, %v426
    %v435 = vsub.f32 %v324, %v425
    %v436 = vsub.f32 %v326, %v426
    %v437 = vsub.f32 %v328, %v425
    %v438 = vsub.f32 %v330, %v426
    %v439 = vsub.f32 %v334, %v425
    %v440 = vsub.f32 %v336, %v426
    %v441 = vsub.f32 %v338, %v425
    %v442 = vsub.f32 %v340, %v426
    %v443 = vsub.f32 %v344, %v425
    %v444 = vsub.f32 %v346, %v426
    %v445 = vsub.f32 %v348, %v425
    %v446 = vsub.f32 %v350, %v426
    %v447 = vsub.f32 %v354, %v425
    %v448 = vsub.f32 %v356, %v426
    %v449 = vsub.f32 %v358, %v425
    %v450 = vsub.f32 %v360, %v426
    %v451 = vsub.f32 %v364, %v425
    %v452 = vsub.f32 %v366, %v426
    %v453 = vsub.f32 %v368, %v425
    %v454 = vsub.f32 %v370, %v426
    %v455 = vsub.f32 %v374, %v425
    %v456 = vsub.f32 %v376, %v426
    %v457 = vsub.f32 %v378, %v425
    %v458 = vsub.f32 %v380, %v426
    %v459 = vmul.f32 %v427, %v427
    %v460 = vmul.f32 %v428, %v428
    %v461 = vmul.f32 %v429, %v429
    %v462 = vmul.f32 %v430, %v430
    %v463 = vmul.f32 %v431, %v431
    %v464 = vmul.f32 %v432, %v432
    %v465 = vmul.f32 %v433, %v433
    %v466 = vmul.f32 %v434, %v434
    %v467 = vmul.f32 %v435, %v435
    %v468 = vmul.f32 %v436, %v436
    %v469 = vmul.f32 %v437, %v437
    %v470 = vmul.f32 %v438, %v438
    %v471 = vmul.f32 %v439, %v439
    %v472 = vmul.f32 %v440, %v440
    %v473 = vmul.f32 %v441, %v441
    %v474 = vmul.f32 %v442, %v442
    %v475 = vmul.f32 %v443, %v443
    %v476 = vmul.f32 %v444, %v444
    %v477 = vmul.f32 %v445, %v445
    %v478 = vmul.f32 %v446, %v446
    %v479 = vmul.f32 %v447, %v447
    %v480 = vmul.f32 %v448, %v448
    %v481 = vmul.f32 %v449, %v449
    %v482 = vmul.f32 %v450, %v450
    %v483 = vmul.f32 %v451, %v451
    %v484 = vmul.f32 %v452, %v452
    %v485 = vmul.f32 %v453, %v453
    %v486 = vmul.f32 %v454, %v454
    %v487 = vmul.f32 %v455, %v455
    %v488 = vmul.f32 %v456, %v456
    %v489 = vmul.f32 %v457, %v457
    %v490 = vmul.f32 %v458, %v458
    %v491 = vadd.f32 %v459, %v461
    %v492 = vadd.f32 %v491, %v463
    %v493 = vadd.f32 %v492, %v465
    %v494 = vadd.f32 %v493, %v467
    %v495 = vadd.f32 %v494, %v469
    %v496 = vadd.f32 %v495, %v471
    %v497 = vadd.f32 %v496, %v473
    %v498 = vadd.f32 %v497, %v475
    %v499 = vadd.f32 %v498, %v477
    %v500 = vadd.f32 %v499, %v479
    %v501 = vadd.f32 %v500, %v481
    %v502 = vadd.f32 %v501, %v483
    %v503 = vadd.f32 %v502, %v485
    %v504 = vadd.f32 %v503, %v487
    %v505 = vadd.f32 %v504, %v489
    %v506 = vrot.slane %v505, 4
    %v507 = vadd.f32 %v505, %v506
    %v508 = vrot.slane %v507, 2
    %v509 = vadd.f32 %v507, %v508
    %v510 = vrot.slane %v509, 1
    %v511 = vadd.f32 %v509, %v510
    %v512 = vadd.f32 %v460, %v462
    %v513 = vadd.f32 %v512, %v464
    %v514 = vadd.f32 %v513, %v466
    %v515 = vadd.f32 %v514, %v468
    %v516 = vadd.f32 %v515, %v470
    %v517 = vadd.f32 %v516, %v472
    %v518 = vadd.f32 %v517, %v474
    %v519 = vadd.f32 %v518, %v476
    %v520 = vadd.f32 %v519, %v478
    %v521 = vadd.f32 %v520, %v480
    %v522 = vadd.f32 %v521, %v482
    %v523 = vadd.f32 %v522, %v484
    %v524 = vadd.f32 %v523, %v486
    %v525 = vadd.f32 %v524, %v488
    %v526 = vadd.f32 %v525, %v490
    %v527 = vrot.slane %v526, 4
    %v528 = vadd.f32 %v526, %v527
    %v529 = vrot.slane %v528, 2
    %v530 = vadd.f32 %v528, %v529
    %v531 = vrot.slane %v530, 1
    %v532 = vadd.f32 %v530, %v531
    %v533 = vmul.f32 %v511, %v424
    %v534 = vmul.f32 %v532, %v424
    %v535 = vadd.f32 %v533, 0.001
    %v536 = vadd.f32 %v534, 0.001
    %v537 = vrsqrt.pop %v535
    %v538 = vrsqrt.pop %v536
    %v539 = vmul.f32 %v427, %v537
    %v540 = vmul.f32 %v428, %v538
    %v541 = vmul.f32 %v429, %v537
    %v542 = vmul.f32 %v430, %v538
    %v543 = vmul.f32 %v431, %v537
    %v544 = vmul.f32 %v432, %v538
    %v545 = vmul.f32 %v433, %v537
    %v546 = vmul.f32 %v434, %v538
    %v547 = vmul.f32 %v435, %v537
    %v548 = vmul.f32 %v436, %v538
    %v549 = vmul.f32 %v437, %v537
    %v550 = vmul.f32 %v438, %v538
    %v551 = vmul.f32 %v439, %v537
    %v552 = vmul.f32 %v440, %v538
    %v553 = vmul.f32 %v441, %v537
    %v554 = vmul.f32 %v442, %v538
    %v555 = vmul.f32 %v443, %v537
    %v556 = vmul.f32 %v444, %v538
    %v557 = vmul.f32 %v445, %v537
    %v558 = vmul.f32 %v446, %v538
    %v559 = vmul.f32 %v447, %v537
    %v560 = vmul.f32 %v448, %v538
    %v561 = vmul.f32 %v449, %v537
    %v562 = vmul.f32 %v450, %v538
    %v563 = vmul.f32 %v451, %v537
    %v564 = vmul.f32 %v452, %v538
    %v565 = vmul.f32 %v453, %v537
    %v566 = vmul.f32 %v454, %v538
    %v567 = vmul.f32 %v455, %v537
    %v568 = vmul.f32 %v456, %v538
    %v569 = vmul.f32 %v457, %v537
    %v570 = vmul.f32 %v458, %v538
    %v571 = vlaneseq
    %v572 = vshrl.u32 %v571, 7
    %v573 = vsub.s32 1, %v572
    %v574 = vrot.slane %v99, %v573
    %v575 = vlaneseq
    %v576 = vshrl.u32 %v575, 7
    %v577 = vsub.s32 1, %v576
    %v578 = vrot.slane %v100, %v577
    %v579 = vmul.f32 %v539, %v574
    %v580 = vmul.f32 %v540, %v578
    %v581 = vmul.f32 %v541, %v574
    %v582 = vmul.f32 %v542, %v578
    %v583 = vmul.f32 %v543, %v574
    %v584 = vmul.f32 %v544, %v578
    %v585 = vmul.f32 %v545, %v574
    %v586 = vmul.f32 %v546, %v578
    %v587 = vmul.f32 %v547, %v574
    %v588 = vmul.f32 %v548, %v578
    %v589 = vmul.f32 %v549, %v574
    %v590 = vmul.f32 %v550, %v578
    %v591 = vmul.f32 %v551, %v574
    %v592 = vmul.f32 %v552, %v578
    %v593 = vmul.f32 %v553, %v574
    %v594 = vmul.f32 %v554, %v578
    %v595 = vmul.f32 %v555, %v574
    %v596 = vmul.f32 %v556, %v578
    %v597 = vmul.f32 %v557, %v574
    %v598 = vmul.f32 %v558, %v578
    %v599 = vmul.f32 %v559, %v574
    %v600 = vmul.f32 %v560, %v578
    %v601 = vmul.f32 %v561, %v574
    %v602 = vmul.f32 %v562, %v578
    %v603 = vmul.f32 %v563, %v574
    %v604 = vmul.f32 %v564, %v578
    %v605 = vmul.f32 %v565, %v574
    %v606 = vmul.f32 %v566, %v578
    %v607 = vmul.f32 %v567, %v574
    %v608 = vmul.f32 %v568, %v578
    %v609 = vmul.f32 %v569, %v574
    %v610 = vmul.f32 %v570, %v578
    %v611 = vlaneseq
    %v612 = vshrl.u32 %v611, 7
    %v613 = vsub.s32 2, %v612
    %v614 = vrot.slane %v99, %v613
    %v615 = vlaneseq
    %v616 = vshrl.u32 %v615, 7
    %v617 = vsub.s32 2, %v616
    %v618 = vrot.slane %v100, %v617
    %v619 = vadd.f32 %v579, %v614
    %v620 = vadd.f32 %v580, %v618
    %v621 = vadd.f32 %v581, %v614
    %v622 = vadd.f32 %v582, %v618
    %v623 = vadd.f32 %v583, %v614
    %v624 = vadd.f32 %v584, %v618
    %v625 = vadd.f32 %v585, %v614
    %v626 = vadd.f32 %v586, %v618
    %v627 = vadd.f32 %v587, %v614
    %v628 = vadd.f32 %v588, %v618
    %v629 = vadd.f32 %v589, %v614
    %v630 = vadd.f32 %v590, %v618
    %v631 = vadd.f32 %v591, %v614
    %v632 = vadd.f32 %v592, %v618
    %v633 = vadd.f32 %v593, %v614
    %v634 = vadd.f32 %v594, %v618
    %v635 = vadd.f32 %v595, %v614
    %v636 = vadd.f32 %v596, %v618
    %v637 = vadd.f32 %v597, %v614
    %v638 = vadd.f32 %v598, %v618
    %v639 = vadd.f32 %v599, %v614
    %v640 = vadd.f32 %v600, %v618
    %v641 = vadd.f32 %v601, %v614
    %v642 = vadd.f32 %v602, %v618
    %v643 = vadd.f32 %v603, %v614
    %v644 = vadd.f32 %v604, %v618
    %v645 = vadd.f32 %v605, %v614
    %v646 = vadd.f32 %v606, %v618
    %v647 = vadd.f32 %v607, %v614
    %v648 = vadd.f32 %v608, %v618
    %v649 = vadd.f32 %v609, %v614
    %v650 = vadd.f32 %v610, %v618
    %v651 = vmax.f32 %v619, 0.0
    %v652 = vmax.f32 %v620, 0.0
    %v653 = vmax.f32 %v621, 0.0
    %v654 = vmax.f32 %v622, 0.0
    %v655 = vmax.f32 %v623, 0.0
    %v656 = vmax.f32 %v624, 0.0
    %v657 = vmax.f32 %v625, 0.0
    %v658 = vmax.f32 %v626, 0.0
    %v659 = vmax.f32 %v627, 0.0
    %v660 = vmax.f32 %v628, 0.0
    %v661 = vmax.f32 %v629, 0.0
    %v662 = vmax.f32 %v630, 0.0
    %v663 = vmax.f32 %v631, 0.0
    %v664 = vmax.f32 %v632, 0.0
    %v665 = vmax.f32 %v633, 0.0
    %v666 = vmax.f32 %v634, 0.0
    %v667 = vmax.f32 %v635, 0.0
    %v668 = vmax.f32 %v636, 0.0
    %v669 = vmax.f32 %v637, 0.0
    %v670 = vmax.f32 %v638, 0.0
    %v671 = vmax.f32 %v639, 0.0
    %v672 = vmax.f32 %v640, 0.0
    %v673 = vmax.f32 %v641, 0.0
    %v674 = vmax.f32 %v642, 0.0
    %v675 = vmax.f32 %v643, 0.0
    %v676 = vmax.f32 %v644, 0.0
    %v677 = vmax.f32 %v645, 0.0
    %v678 = vmax.f32 %v646, 0.0
    %v679 = vmax.f32 %v647, 0.0
    %v680 = vmax.f32 %v648, 0.0
    %v681 = vmax.f32 %v649, 0.0
    %v682 = vmax.f32 %v650, 0.0
    %v683 = vld [vmem:[%s0 + $0x100] sm:$0xf]
    %v684 = vld [vmem:[%s0 + $0x108] sm:$0xf]
    %v685 = vld [vmem:[%s0 + $0x110] sm:$0xf]
    %v686 = vld [vmem:[%s0 + $0x118] sm:$0xf]
    %v687 = vld [vmem:[%s0 + $0x120] sm:$0xf]
    %v688 = vld [vmem:[%s0 + $0x128] sm:$0xf]
    %v689 = vld [vmem:[%s0 + $0x130] sm:$0xf]
    %v690 = vld [vmem:[%s0 + $0x138] sm:$0xf]
    %v691 = vld [vmem:[%s0 + $0x140] sm:$0xf]
    %v692 = vld [vmem:[%s0 + $0x148] sm:$0xf]
    %v693 = vld [vmem:[%s0 + $0x150] sm:$0xf]
    %v694 = vld [vmem:[%s0 + $0x158] sm:$0xf]
    %v695 = vld [vmem:[%s0 + $0x160] sm:$0xf]
    %v696 = vld [vmem:[%s0 + $0x168] sm:$0xf]
    %v697 = vld [vmem:[%s0 + $0x170] sm:$0xf]
    %v698 = vld [vmem:[%s0 + $0x178] sm:$0xf]
    %v699 = vld [vmem:[%s1 + $0x10] sm:$0x7]
    %v700 = vpack.c.bf16 %v653, %v651
    %v701 = vpack.c.bf16 %v657, %v655
    %v702 = vpack.c.bf16 %v661, %v659
    %v703 = vpack.c.bf16 %v665, %v663
    %v704 = vpack.c.bf16 %v669, %v667
    %v705 = vpack.c.bf16 %v673, %v671
    %v706 = vpack.c.bf16 %v677, %v675
    %v707 = vpack.c.bf16 %v681, %v679
    %v708 = vlaneseq
    %v709 = vshrl.u32 %v708, 7
    %v710 = vsub.s32 0, %v709
    %v711 = vrot.slane %v699, %v710
    %v728 = vunpack.c.l.b16 %v683
    %v729 = vunpack.c.l.b16 %v684
    %v730 = vunpack.c.l.b16 %v685
    %v731 = vunpack.c.l.b16 %v686
    %v732 = vunpack.c.l.b16 %v687
    %v733 = vunpack.c.l.b16 %v688
    %v734 = vunpack.c.l.b16 %v689
    %v735 = vunpack.c.l.b16 %v690
    %v736 = vunpack.c.l.b16 %v691
    %v737 = vunpack.c.l.b16 %v692
    %v738 = vunpack.c.l.b16 %v693
    %v739 = vunpack.c.l.b16 %v694
    %v740 = vunpack.c.l.b16 %v695
    %v741 = vunpack.c.l.b16 %v696
    %v742 = vunpack.c.l.b16 %v697
    %v743 = vunpack.c.l.b16 %v698
    %v744 = vpack.c.b16 %v729, %v728
    %v745 = vpack.c.b16 %v731, %v730
    %v746 = vpack.c.b16 %v733, %v732
    %v747 = vpack.c.b16 %v735, %v734
    %v748 = vpack.c.b16 %v737, %v736
    %v749 = vpack.c.b16 %v739, %v738
    %v750 = vpack.c.b16 %v741, %v740
    %v751 = vpack.c.b16 %v743, %v742
    %760 = vmatprep.subr.bf16.mxu0 0
    %761 = vmatpush1.bf16.msra.mxu0 %v751
    %762 = vmatprep.subr.bf16.mxu0 0
    %763 = vmatpush1.bf16.msra.mxu0 %v750
    %764 = vmatprep.subr.bf16.mxu0 0
    %765 = vmatpush1.bf16.msra.mxu0 %v749
    %766 = vmatprep.subr.bf16.mxu0 0
    %767 = vmatpush1.bf16.msra.mxu0 %v748
    %768 = vmatprep.subr.bf16.mxu0 0
    %769 = vmatpush1.bf16.msra.mxu0 %v747
    %770 = vmatprep.subr.bf16.mxu0 0
    %771 = vmatpush1.bf16.msra.mxu0 %v746
    %772 = vmatprep.subr.bf16.mxu0 0
    %773 = vmatpush1.bf16.msra.mxu0 %v745
    %774 = vmatprep.subr.bf16.mxu0 0
    %775 = vmatpush1.bf16.msra.mxu0 %v744
    %776 = vmatprep.subr.bf16.mxu0 0
    %777 = vmatpush2.bf16.msra.mxu0 0
    %778 = vmatprep.subr.bf16.mxu0 0
    %779 = vmatpush2.bf16.msra.mxu0 0
    %780 = vmatprep.subr.bf16.mxu0 0
    %781 = vmatpush2.bf16.msra.mxu0 0
    %782 = vmatprep.subr.bf16.mxu0 0
    %783 = vmatpush2.bf16.msra.mxu0 0
    %784 = vmatprep.subr.bf16.mxu0 0
    %785 = vmatpush2.bf16.msra.mxu0 0
    %786 = vmatprep.subr.bf16.mxu0 0
    %787 = vmatpush2.bf16.msra.mxu0 0
    %788 = vmatprep.subr.bf16.mxu0 0
    %789 = vmatpush2.bf16.msra.mxu0 0
    %790 = vmatprep.subr.bf16.mxu0 0
    %791 = vmatpush2.bf16.msra.mxu0 0
    %792 = vmatprep.mubr.bf16.mxu0 0
    %793 = vmatmul.mubr.bf16.gmra.mxu0 %v700
    %v794 = vpop.f32.mrf.mxu0
    %v795 = vadd.f32 %v711, %v794
    %v796 = vpop.f32.mrf.mxu0
    %v797 = vpop.f32.mrf.mxu0
    %v798 = vadd.f32 %v711, %v797
    %v799 = vpop.f32.mrf.mxu0
    %800 = vmatprep.mubr.bf16.mxu0 0
    %801 = vmatmul.mubr.bf16.gmra.mxu0 %v701
    %v802 = vpop.f32.mrf.mxu0
    %v803 = vadd.f32 %v711, %v802
    %v804 = vpop.f32.mrf.mxu0
    %v805 = vpop.f32.mrf.mxu0
    %v806 = vadd.f32 %v711, %v805
    %v807 = vpop.f32.mrf.mxu0
    %808 = vmatprep.mubr.bf16.mxu0 0
    %809 = vmatmul.mubr.bf16.gmra.mxu0 %v702
    %v810 = vpop.f32.mrf.mxu0
    %v811 = vadd.f32 %v711, %v810
    %v812 = vpop.f32.mrf.mxu0
    %v813 = vpop.f32.mrf.mxu0
    %v814 = vadd.f32 %v711, %v813
    %v815 = vpop.f32.mrf.mxu0
    %816 = vmatprep.mubr.bf16.mxu0 0
    %817 = vmatmul.mubr.bf16.gmra.mxu0 %v703
    %v818 = vpop.f32.mrf.mxu0
    %v819 = vadd.f32 %v711, %v818
    %v820 = vpop.f32.mrf.mxu0
    %v821 = vpop.f32.mrf.mxu0
    %v822 = vadd.f32 %v711, %v821
    %v823 = vpop.f32.mrf.mxu0
    %824 = vmatprep.mubr.bf16.mxu0 0
    %825 = vmatmul.mubr.bf16.gmra.mxu0 %v704
    %v826 = vpop.f32.mrf.mxu0
    %v827 = vadd.f32 %v711, %v826
    %v828 = vpop.f32.mrf.mxu0
    %v829 = vpop.f32.mrf.mxu0
    %v830 = vadd.f32 %v711, %v829
    %v831 = vpop.f32.mrf.mxu0
    %832 = vmatprep.mubr.bf16.mxu0 0
    %833 = vmatmul.mubr.bf16.gmra.mxu0 %v705
    %v834 = vpop.f32.mrf.mxu0
    %v835 = vadd.f32 %v711, %v834
    %v836 = vpop.f32.mrf.mxu0
    %v837 = vpop.f32.mrf.mxu0
    %v838 = vadd.f32 %v711, %v837
    %v839 = vpop.f32.mrf.mxu0
    %840 = vmatprep.mubr.bf16.mxu0 0
    %841 = vmatmul.mubr.bf16.gmra.mxu0 %v706
    %v842 = vpop.f32.mrf.mxu0
    %v843 = vadd.f32 %v711, %v842
    %v844 = vpop.f32.mrf.mxu0
    %v845 = vpop.f32.mrf.mxu0
    %v846 = vadd.f32 %v711, %v845
    %v847 = vpop.f32.mrf.mxu0
    %848 = vmatprep.mubr.bf16.mxu0 0
    %849 = vmatmul.mubr.bf16.gmra.mxu0 %v707
    %v850 = vpop.f32.mrf.mxu0
    %v851 = vadd.f32 %v711, %v850
    %v852 = vpop.f32.mrf.mxu0
    %v853 = vpop.f32.mrf.mxu0
    %v854 = vadd.f32 %v711, %v853
    %v855 = vpop.f32.mrf.mxu0
    %856 = vdwg.mxu0
    %vm857 = vcmask 523264
    %v858 = vsel %vm857, %v795, 0.0
    %v859 = vsel %vm857, %v798, 0.0
    %v860 = vadd.f32 %v858, %v859
    %v861 = vsel %vm857, %v803, 0.0
    %v862 = vadd.f32 %v860, %v861
    %v863 = vsel %vm857, %v806, 0.0
    %v864 = vadd.f32 %v862, %v863
    %v865 = vsel %vm857, %v811, 0.0
    %v866 = vadd.f32 %v864, %v865
    %v867 = vsel %vm857, %v814, 0.0
    %v868 = vadd.f32 %v866, %v867
    %v869 = vsel %vm857, %v819, 0.0
    %v870 = vadd.f32 %v868, %v869
    %v871 = vsel %vm857, %v822, 0.0
    %v872 = vadd.f32 %v870, %v871
    %v873 = vsel %vm857, %v827, 0.0
    %v874 = vadd.f32 %v872, %v873
    %v875 = vsel %vm857, %v830, 0.0
    %v876 = vadd.f32 %v874, %v875
    %v877 = vsel %vm857, %v835, 0.0
    %v878 = vadd.f32 %v876, %v877
    %v879 = vsel %vm857, %v838, 0.0
    %v880 = vadd.f32 %v878, %v879
    %v881 = vsel %vm857, %v843, 0.0
    %v882 = vadd.f32 %v880, %v881
    %v883 = vsel %vm857, %v846, 0.0
    %v884 = vadd.f32 %v882, %v883
    %v885 = vsel %vm857, %v851, 0.0
    %v886 = vadd.f32 %v884, %v885
    %v887 = vsel %vm857, %v854, 0.0
    %v888 = vadd.f32 %v886, %v887
    %v889 = vrot.slane %v888, 4
    %v890 = vadd.f32 %v888, %v889
    %v891 = vrot.slane %v890, 2
    %v892 = vadd.f32 %v890, %v891
    %v893 = vrot.slane %v892, 1
    %v894 = vadd.f32 %v892, %v893
    %v895 = vmul.f32 %v894, %v424
    %v896 = vsub.f32 %v795, %v895
    %v897 = vsub.f32 %v798, %v895
    %v898 = vsub.f32 %v803, %v895
    %v899 = vsub.f32 %v806, %v895
    %v900 = vsub.f32 %v811, %v895
    %v901 = vsub.f32 %v814, %v895
    %v902 = vsub.f32 %v819, %v895
    %v903 = vsub.f32 %v822, %v895
    %v904 = vsub.f32 %v827, %v895
    %v905 = vsub.f32 %v830, %v895
    %v906 = vsub.f32 %v835, %v895
    %v907 = vsub.f32 %v838, %v895
    %v908 = vsub.f32 %v843, %v895
    %v909 = vsub.f32 %v846, %v895
    %v910 = vsub.f32 %v851, %v895
    %v911 = vsub.f32 %v854, %v895
    %v912 = vmul.f32 %v896, %v896
    %v913 = vmul.f32 %v897, %v897
    %v914 = vmul.f32 %v898, %v898
    %v915 = vmul.f32 %v899, %v899
    %v916 = vmul.f32 %v900, %v900
    %v917 = vmul.f32 %v901, %v901
    %v918 = vmul.f32 %v902, %v902
    %v919 = vmul.f32 %v903, %v903
    %v920 = vmul.f32 %v904, %v904
    %v921 = vmul.f32 %v905, %v905
    %v922 = vmul.f32 %v906, %v906
    %v923 = vmul.f32 %v907, %v907
    %v924 = vmul.f32 %v908, %v908
    %v925 = vmul.f32 %v909, %v909
    %v926 = vmul.f32 %v910, %v910
    %v927 = vmul.f32 %v911, %v911
    %v928 = vsel %vm857, %v912, 0.0
    %v929 = vsel %vm857, %v913, 0.0
    %v930 = vadd.f32 %v928, %v929
    %v931 = vsel %vm857, %v914, 0.0
    %v932 = vadd.f32 %v930, %v931
    %v933 = vsel %vm857, %v915, 0.0
    %v934 = vadd.f32 %v932, %v933
    %v935 = vsel %vm857, %v916, 0.0
    %v936 = vadd.f32 %v934, %v935
    %v937 = vsel %vm857, %v917, 0.0
    %v938 = vadd.f32 %v936, %v937
    %v939 = vsel %vm857, %v918, 0.0
    %v940 = vadd.f32 %v938, %v939
    %v941 = vsel %vm857, %v919, 0.0
    %v942 = vadd.f32 %v940, %v941
    %v943 = vsel %vm857, %v920, 0.0
    %v944 = vadd.f32 %v942, %v943
    %v945 = vsel %vm857, %v921, 0.0
    %v946 = vadd.f32 %v944, %v945
    %v947 = vsel %vm857, %v922, 0.0
    %v948 = vadd.f32 %v946, %v947
    %v949 = vsel %vm857, %v923, 0.0
    %v950 = vadd.f32 %v948, %v949
    %v951 = vsel %vm857, %v924, 0.0
    %v952 = vadd.f32 %v950, %v951
    %v953 = vsel %vm857, %v925, 0.0
    %v954 = vadd.f32 %v952, %v953
    %v955 = vsel %vm857, %v926, 0.0
    %v956 = vadd.f32 %v954, %v955
    %v957 = vsel %vm857, %v927, 0.0
    %v958 = vadd.f32 %v956, %v957
    %v959 = vrot.slane %v958, 4
    %v960 = vadd.f32 %v958, %v959
    %v961 = vrot.slane %v960, 2
    %v962 = vadd.f32 %v960, %v961
    %v963 = vrot.slane %v962, 1
    %v964 = vadd.f32 %v962, %v963
    %v965 = vmul.f32 %v964, %v424
    %v966 = vadd.f32 %v965, 0.001
    %v967 = vrsqrt.pop %v966
    %v968 = vmul.f32 %v896, %v967
    %v969 = vmul.f32 %v897, %v967
    %v970 = vmul.f32 %v898, %v967
    %v971 = vmul.f32 %v899, %v967
    %v972 = vmul.f32 %v900, %v967
    %v973 = vmul.f32 %v901, %v967
    %v974 = vmul.f32 %v902, %v967
    %v975 = vmul.f32 %v903, %v967
    %v976 = vmul.f32 %v904, %v967
    %v977 = vmul.f32 %v905, %v967
    %v978 = vmul.f32 %v906, %v967
    %v979 = vmul.f32 %v907, %v967
    %v980 = vmul.f32 %v908, %v967
    %v981 = vmul.f32 %v909, %v967
    %v982 = vmul.f32 %v910, %v967
    %v983 = vmul.f32 %v911, %v967
    %v984 = vlaneseq
    %v985 = vshrl.u32 %v984, 7
    %v986 = vsub.s32 1, %v985
    %v987 = vrot.slane %v699, %v986
    %v988 = vmul.f32 %v968, %v987
    %v989 = vmul.f32 %v969, %v987
    %v990 = vmul.f32 %v970, %v987
    %v991 = vmul.f32 %v971, %v987
    %v992 = vmul.f32 %v972, %v987
    %v993 = vmul.f32 %v973, %v987
    %v994 = vmul.f32 %v974, %v987
    %v995 = vmul.f32 %v975, %v987
    %v996 = vmul.f32 %v976, %v987
    %v997 = vmul.f32 %v977, %v987
    %v998 = vmul.f32 %v978, %v987
    %v999 = vmul.f32 %v979, %v987
    %v1000 = vmul.f32 %v980, %v987
    %v1001 = vmul.f32 %v981, %v987
    %v1002 = vmul.f32 %v982, %v987
    %v1003 = vmul.f32 %v983, %v987
    %v1004 = vlaneseq
    %v1005 = vshrl.u32 %v1004, 7
    %v1006 = vsub.s32 2, %v1005
    %v1007 = vrot.slane %v699, %v1006
    %v1008 = vadd.f32 %v988, %v1007
    %v1009 = vadd.f32 %v989, %v1007
    %v1010 = vadd.f32 %v990, %v1007
    %v1011 = vadd.f32 %v991, %v1007
    %v1012 = vadd.f32 %v992, %v1007
    %v1013 = vadd.f32 %v993, %v1007
    %v1014 = vadd.f32 %v994, %v1007
    %v1015 = vadd.f32 %v995, %v1007
    %v1016 = vadd.f32 %v996, %v1007
    %v1017 = vadd.f32 %v997, %v1007
    %v1018 = vadd.f32 %v998, %v1007
    %v1019 = vadd.f32 %v999, %v1007
    %v1020 = vadd.f32 %v1000, %v1007
    %v1021 = vadd.f32 %v1001, %v1007
    %v1022 = vadd.f32 %v1002, %v1007
    %v1023 = vadd.f32 %v1003, %v1007
    %v1024 = vmax.f32 %v1008, 0.0
    %v1025 = vmax.f32 %v1009, 0.0
    %v1026 = vmax.f32 %v1010, 0.0
    %v1027 = vmax.f32 %v1011, 0.0
    %v1028 = vmax.f32 %v1012, 0.0
    %v1029 = vmax.f32 %v1013, 0.0
    %v1030 = vmax.f32 %v1014, 0.0
    %v1031 = vmax.f32 %v1015, 0.0
    %v1032 = vmax.f32 %v1016, 0.0
    %v1033 = vmax.f32 %v1017, 0.0
    %v1034 = vmax.f32 %v1018, 0.0
    %v1035 = vmax.f32 %v1019, 0.0
    %v1036 = vmax.f32 %v1020, 0.0
    %v1037 = vmax.f32 %v1021, 0.0
    %v1038 = vmax.f32 %v1022, 0.0
    %v1039 = vmax.f32 %v1023, 0.0
    %v1040 = vld [vmem:[%s0 + $0x180] sm:$0xf]
    %v1041 = vld [vmem:[%s0 + $0x188] sm:$0xf]
    %v1042 = vld [vmem:[%s0 + $0x190] sm:$0xf]
    %v1043 = vld [vmem:[%s0 + $0x198] sm:$0xf]
    %v1044 = vld [vmem:[%s0 + $0x1a0] sm:$0xf]
    %v1045 = vld [vmem:[%s0 + $0x1a8] sm:$0xf]
    %v1046 = vld [vmem:[%s0 + $0x1b0] sm:$0xf]
    %v1047 = vld [vmem:[%s0 + $0x1b8] sm:$0xf]
    %v1048 = vld [vmem:[%s0 + $0x1c0] sm:$0xf]
    %v1049 = vld [vmem:[%s0 + $0x1c8] sm:$0xf]
    %v1050 = vld [vmem:[%s0 + $0x1d0] sm:$0xf]
    %v1051 = vld [vmem:[%s0 + $0x1d8] sm:$0xf]
    %v1052 = vld [vmem:[%s0 + $0x1e0] sm:$0xf]
    %v1053 = vld [vmem:[%s0 + $0x1e8] sm:$0xf]
    %v1054 = vld [vmem:[%s0 + $0x1f0] sm:$0xf]
    %v1055 = vld [vmem:[%s0 + $0x1f8] sm:$0xf]
    %v1056 = vld [vmem:[%s0 + $0x200] sm:$0xf]
    %v1057 = vld [vmem:[%s0 + $0x208] sm:$0xf]
    %v1058 = vld [vmem:[%s0 + $0x210] sm:$0xf]
    %v1059 = vld [vmem:[%s0 + $0x218] sm:$0xf]
    %v1060 = vld [vmem:[%s0 + $0x220] sm:$0xf]
    %v1061 = vld [vmem:[%s0 + $0x228] sm:$0xf]
    %v1062 = vld [vmem:[%s0 + $0x230] sm:$0xf]
    %v1063 = vld [vmem:[%s0 + $0x238] sm:$0xf]
    %v1064 = vld [vmem:[%s1 + $0x20] ss:$0 sm:$0xff]
    %1081 = vrot.lane.b32.xlu0 %v652, 64
    %v1082 = vpop.permute.xlu0 %1081
    %1083 = vrot.lane.b32.xlu0 %v654, 64
    %v1084 = vpop.permute.xlu0 %1083
    %1085 = vrot.lane.b32.xlu0 %v656, 64
    %v1086 = vpop.permute.xlu0 %1085
    %1087 = vrot.lane.b32.xlu0 %v658, 64
    %v1088 = vpop.permute.xlu0 %1087
    %1089 = vrot.lane.b32.xlu0 %v660, 64
    %v1090 = vpop.permute.xlu0 %1089
    %1091 = vrot.lane.b32.xlu0 %v662, 64
    %v1092 = vpop.permute.xlu0 %1091
    %1093 = vrot.lane.b32.xlu0 %v664, 64
    %v1094 = vpop.permute.xlu0 %1093
    %1095 = vrot.lane.b32.xlu0 %v666, 64
    %v1096 = vpop.permute.xlu0 %1095
    %1097 = vrot.lane.b32.xlu0 %v668, 64
    %v1098 = vpop.permute.xlu0 %1097
    %1099 = vrot.lane.b32.xlu0 %v670, 64
    %v1100 = vpop.permute.xlu0 %1099
    %1101 = vrot.lane.b32.xlu0 %v672, 64
    %v1102 = vpop.permute.xlu0 %1101
    %1103 = vrot.lane.b32.xlu0 %v674, 64
    %v1104 = vpop.permute.xlu0 %1103
    %1105 = vrot.lane.b32.xlu0 %v676, 64
    %v1106 = vpop.permute.xlu0 %1105
    %1107 = vrot.lane.b32.xlu0 %v678, 64
    %v1108 = vpop.permute.xlu0 %1107
    %1109 = vrot.lane.b32.xlu0 %v680, 64
    %v1110 = vpop.permute.xlu0 %1109
    %1111 = vrot.lane.b32.xlu0 %v682, 64
    %v1112 = vpop.permute.xlu0 %1111
    %v1129 = vsel %vm857, %v1024, %v1082
    %v1130 = vsel %vm857, %v1025, %v1084
    %v1131 = vsel %vm857, %v1026, %v1086
    %v1132 = vsel %vm857, %v1027, %v1088
    %v1133 = vsel %vm857, %v1028, %v1090
    %v1134 = vsel %vm857, %v1029, %v1092
    %v1135 = vsel %vm857, %v1030, %v1094
    %v1136 = vsel %vm857, %v1031, %v1096
    %v1137 = vsel %vm857, %v1032, %v1098
    %v1138 = vsel %vm857, %v1033, %v1100
    %v1139 = vsel %vm857, %v1034, %v1102
    %v1140 = vsel %vm857, %v1035, %v1104
    %v1141 = vsel %vm857, %v1036, %v1106
    %v1142 = vsel %vm857, %v1037, %v1108
    %v1143 = vsel %vm857, %v1038, %v1110
    %v1144 = vsel %vm857, %v1039, %v1112
    %v1145 = vpack.c.bf16 %v1130, %v1129
    %v1146 = vpack.c.bf16 %v1084, %v1082
    %v1147 = vpack.c.bf16 %v1132, %v1131
    %v1148 = vpack.c.bf16 %v1088, %v1086
    %v1149 = vpack.c.bf16 %v1134, %v1133
    %v1150 = vpack.c.bf16 %v1092, %v1090
    %v1151 = vpack.c.bf16 %v1136, %v1135
    %v1152 = vpack.c.bf16 %v1096, %v1094
    %v1153 = vpack.c.bf16 %v1138, %v1137
    %v1154 = vpack.c.bf16 %v1100, %v1098
    %v1155 = vpack.c.bf16 %v1140, %v1139
    %v1156 = vpack.c.bf16 %v1104, %v1102
    %v1157 = vpack.c.bf16 %v1142, %v1141
    %v1158 = vpack.c.bf16 %v1108, %v1106
    %v1159 = vpack.c.bf16 %v1144, %v1143
    %v1160 = vpack.c.bf16 %v1112, %v1110
    %v1185 = vunpack.c.l.b16 %v1040
    %v1186 = vunpack.c.l.b16 %v1041
    %v1187 = vunpack.c.l.b16 %v1042
    %v1188 = vunpack.c.l.b16 %v1043
    %v1189 = vunpack.c.l.b16 %v1044
    %v1190 = vunpack.c.l.b16 %v1045
    %v1191 = vunpack.c.l.b16 %v1046
    %v1192 = vunpack.c.l.b16 %v1047
    %v1193 = vunpack.c.l.b16 %v1048
    %v1194 = vunpack.c.l.b16 %v1049
    %v1195 = vunpack.c.l.b16 %v1050
    %v1196 = vunpack.c.l.b16 %v1051
    %v1197 = vunpack.c.l.b16 %v1052
    %v1198 = vunpack.c.l.b16 %v1053
    %v1199 = vunpack.c.l.b16 %v1054
    %v1200 = vunpack.c.l.b16 %v1055
    %v1201 = vunpack.c.l.b16 %v1056
    %v1202 = vunpack.c.l.b16 %v1057
    %v1203 = vunpack.c.l.b16 %v1058
    %v1204 = vunpack.c.l.b16 %v1059
    %v1205 = vunpack.c.l.b16 %v1060
    %v1206 = vunpack.c.l.b16 %v1061
    %v1207 = vunpack.c.l.b16 %v1062
    %v1208 = vunpack.c.l.b16 %v1063
    %v1209 = vpack.c.b16 %v1186, %v1185
    %v1210 = vpack.c.b16 %v1188, %v1187
    %v1211 = vpack.c.b16 %v1190, %v1189
    %v1212 = vpack.c.b16 %v1192, %v1191
    %v1213 = vpack.c.b16 %v1194, %v1193
    %v1214 = vpack.c.b16 %v1196, %v1195
    %v1215 = vpack.c.b16 %v1198, %v1197
    %v1216 = vpack.c.b16 %v1200, %v1199
    %v1217 = vpack.c.b16 %v1202, %v1201
    %v1218 = vpack.c.b16 %v1204, %v1203
    %v1219 = vpack.c.b16 %v1206, %v1205
    %v1220 = vpack.c.b16 %v1208, %v1207
    %v1234 = vsel %vm857, %v1146, 0
    %v1237 = vsel %vm857, %v1148, 0
    %v1240 = vsel %vm857, %v1150, 0
    %v1243 = vsel %vm857, %v1152, 0
    %v1246 = vsel %vm857, %v1154, 0
    %v1249 = vsel %vm857, %v1156, 0
    %v1252 = vsel %vm857, %v1158, 0
    %v1255 = vsel %vm857, %v1160, 0
    %1257 = vmatprep.subr.bf16.mxu0 0
    %1258 = vmatpush1.bf16.msra.mxu0 %v1216
    %1259 = vmatprep.subr.bf16.mxu0 0
    %1260 = vmatpush1.bf16.msra.mxu0 %v1215
    %1261 = vmatprep.subr.bf16.mxu0 0
    %1262 = vmatpush1.bf16.msra.mxu0 %v1214
    %1263 = vmatprep.subr.bf16.mxu0 0
    %1264 = vmatpush1.bf16.msra.mxu0 %v1213
    %1265 = vmatprep.subr.bf16.mxu0 0
    %1266 = vmatpush1.bf16.msra.mxu0 %v1212
    %1267 = vmatprep.subr.bf16.mxu0 0
    %1268 = vmatpush1.bf16.msra.mxu0 %v1211
    %1269 = vmatprep.subr.bf16.mxu0 0
    %1270 = vmatpush1.bf16.msra.mxu0 %v1210
    %1271 = vmatprep.subr.bf16.mxu0 0
    %1272 = vmatpush1.bf16.msra.mxu0 %v1209
    %1273 = vmatprep.subr.bf16.mxu0 0
    %1274 = vmatpush2.bf16.msra.mxu0 0
    %1275 = vmatprep.subr.bf16.mxu0 0
    %1276 = vmatpush2.bf16.msra.mxu0 0
    %1277 = vmatprep.subr.bf16.mxu0 0
    %1278 = vmatpush2.bf16.msra.mxu0 0
    %1279 = vmatprep.subr.bf16.mxu0 0
    %1280 = vmatpush2.bf16.msra.mxu0 0
    %1281 = vmatprep.subr.bf16.mxu0 0
    %1282 = vmatpush2.bf16.msra.mxu0 %v1220
    %1283 = vmatprep.subr.bf16.mxu0 0
    %1284 = vmatpush2.bf16.msra.mxu0 %v1219
    %1285 = vmatprep.subr.bf16.mxu0 0
    %1286 = vmatpush2.bf16.msra.mxu0 %v1218
    %1287 = vmatprep.subr.bf16.mxu0 0
    %1288 = vmatpush2.bf16.msra.mxu0 %v1217
    %1289 = vmatprep.mubr.bf16.mxu0 %v1234
    %1290 = vmatmul.mubr.bf16.gmra.mxu0 %v1145
    %v1291 = vpop.f32.mrf.mxu0
    %v1292 = vadd.f32 %v1064, %v1291
    %v1293 = vpop.f32.mrf.mxu0
    %v1294 = vpop.f32.mrf.mxu0
    %v1295 = vadd.f32 %v1064, %v1294
    %v1296 = vpop.f32.mrf.mxu0
    %1297 = vmatprep.mubr.bf16.mxu0 %v1237
    %1298 = vmatmul.mubr.bf16.gmra.mxu0 %v1147
    %v1299 = vpop.f32.mrf.mxu0
    %v1300 = vadd.f32 %v1064, %v1299
    %v1301 = vpop.f32.mrf.mxu0
    %v1302 = vpop.f32.mrf.mxu0
    %v1303 = vadd.f32 %v1064, %v1302
    %v1304 = vpop.f32.mrf.mxu0
    %1305 = vmatprep.mubr.bf16.mxu0 %v1240
    %1306 = vmatmul.mubr.bf16.gmra.mxu0 %v1149
    %v1307 = vpop.f32.mrf.mxu0
    %v1308 = vadd.f32 %v1064, %v1307
    %v1309 = vpop.f32.mrf.mxu0
    %v1310 = vpop.f32.mrf.mxu0
    %v1311 = vadd.f32 %v1064, %v1310
    %v1312 = vpop.f32.mrf.mxu0
    %1313 = vmatprep.mubr.bf16.mxu0 %v1243
    %1314 = vmatmul.mubr.bf16.gmra.mxu0 %v1151
    %v1315 = vpop.f32.mrf.mxu0
    %v1316 = vadd.f32 %v1064, %v1315
    %v1317 = vpop.f32.mrf.mxu0
    %v1318 = vpop.f32.mrf.mxu0
    %v1319 = vadd.f32 %v1064, %v1318
    %v1320 = vpop.f32.mrf.mxu0
    %1321 = vmatprep.mubr.bf16.mxu0 %v1246
    %1322 = vmatmul.mubr.bf16.gmra.mxu0 %v1153
    %v1323 = vpop.f32.mrf.mxu0
    %v1324 = vadd.f32 %v1064, %v1323
    %v1325 = vpop.f32.mrf.mxu0
    %v1326 = vpop.f32.mrf.mxu0
    %v1327 = vadd.f32 %v1064, %v1326
    %v1328 = vpop.f32.mrf.mxu0
    %1329 = vmatprep.mubr.bf16.mxu0 %v1249
    %1330 = vmatmul.mubr.bf16.gmra.mxu0 %v1155
    %v1331 = vpop.f32.mrf.mxu0
    %v1332 = vadd.f32 %v1064, %v1331
    %v1333 = vpop.f32.mrf.mxu0
    %v1334 = vpop.f32.mrf.mxu0
    %v1335 = vadd.f32 %v1064, %v1334
    %v1336 = vpop.f32.mrf.mxu0
    %1337 = vmatprep.mubr.bf16.mxu0 %v1252
    %1338 = vmatmul.mubr.bf16.gmra.mxu0 %v1157
    %v1339 = vpop.f32.mrf.mxu0
    %v1340 = vadd.f32 %v1064, %v1339
    %v1341 = vpop.f32.mrf.mxu0
    %v1342 = vpop.f32.mrf.mxu0
    %v1343 = vadd.f32 %v1064, %v1342
    %v1344 = vpop.f32.mrf.mxu0
    %1345 = vmatprep.mubr.bf16.mxu0 %v1255
    %1346 = vmatmul.mubr.bf16.gmra.mxu0 %v1159
    %v1347 = vpop.f32.mrf.mxu0
    %v1348 = vadd.f32 %v1064, %v1347
    %v1349 = vpop.f32.mrf.mxu0
    %v1350 = vpop.f32.mrf.mxu0
    %v1351 = vadd.f32 %v1064, %v1350
    %v1352 = vpop.f32.mrf.mxu0
    %1353 = vdwg.mxu0
    %v1354 = vmin.f32 %v1292, 10.0
    %v1355 = vmin.f32 %v1295, 10.0
    %v1356 = vmin.f32 %v1300, 10.0
    %v1357 = vmin.f32 %v1303, 10.0
    %v1358 = vmin.f32 %v1308, 10.0
    %v1359 = vmin.f32 %v1311, 10.0
    %v1360 = vmin.f32 %v1316, 10.0
    %v1361 = vmin.f32 %v1319, 10.0
    %v1362 = vmin.f32 %v1324, 10.0
    %v1363 = vmin.f32 %v1327, 10.0
    %v1364 = vmin.f32 %v1332, 10.0
    %v1365 = vmin.f32 %v1335, 10.0
    %v1366 = vmin.f32 %v1340, 10.0
    %v1367 = vmin.f32 %v1343, 10.0
    %v1368 = vmin.f32 %v1348, 10.0
    %v1369 = vmin.f32 %v1351, 10.0
    %v1370 = vmul.f32 %v1354, 1.442695
    %v1371 = vpow.pop %v1370
    %v1372 = vmul.f32 %v1355, 1.442695
    %v1373 = vpow.pop %v1372
    %v1374 = vmul.f32 %v1356, 1.442695
    %v1375 = vpow.pop %v1374
    %v1376 = vmul.f32 %v1357, 1.442695
    %v1377 = vpow.pop %v1376
    %v1378 = vmul.f32 %v1358, 1.442695
    %v1379 = vpow.pop %v1378
    %v1380 = vmul.f32 %v1359, 1.442695
    %v1381 = vpow.pop %v1380
    %v1382 = vmul.f32 %v1360, 1.442695
    %v1383 = vpow.pop %v1382
    %v1384 = vmul.f32 %v1361, 1.442695
    %v1385 = vpow.pop %v1384
    %v1386 = vmul.f32 %v1362, 1.442695
    %v1387 = vpow.pop %v1386
    %v1388 = vmul.f32 %v1363, 1.442695
    %v1389 = vpow.pop %v1388
    %v1390 = vmul.f32 %v1364, 1.442695
    %v1391 = vpow.pop %v1390
    %v1392 = vmul.f32 %v1365, 1.442695
    %v1393 = vpow.pop %v1392
    %v1394 = vmul.f32 %v1366, 1.442695
    %v1395 = vpow.pop %v1394
    %v1396 = vmul.f32 %v1367, 1.442695
    %v1397 = vpow.pop %v1396
    %v1398 = vmul.f32 %v1368, 1.442695
    %v1399 = vpow.pop %v1398
    %v1400 = vmul.f32 %v1369, 1.442695
    %v1401 = vpow.pop %v1400
    %v1402 = vld [vmem:[%s2 + $0x10] sm:$0xff]
    %v1403 = vld [vmem:[%s2 + $0x28] sm:$0xff]
    %v1404 = vld [vmem:[%s2 + $0x40] sm:$0xff]
    %v1405 = vld [vmem:[%s2 + $0x58] sm:$0xff]
    %v1406 = vld [vmem:[%s2 + $0x70] sm:$0xff]
    %v1407 = vld [vmem:[%s2 + $0x88] sm:$0xff]
    %v1408 = vld [vmem:[%s2 + $0xa0] sm:$0xff]
    %v1409 = vld [vmem:[%s2 + $0xb8] sm:$0xff]
    %v1410 = vld [vmem:[%s2 + $0xd0] sm:$0xff]
    %v1411 = vld [vmem:[%s2 + $0xe8] sm:$0xff]
    %v1412 = vld [vmem:[%s2 + $0x100] sm:$0xff]
    %v1413 = vld [vmem:[%s2 + $0x118] sm:$0xff]
    %v1414 = vld [vmem:[%s2 + $0x130] sm:$0xff]
    %v1415 = vld [vmem:[%s2 + $0x148] sm:$0xff]
    %v1416 = vld [vmem:[%s2 + $0x160] sm:$0xff]
    %v1417 = vld [vmem:[%s2 + $0x178] sm:$0xff]
    %1434 = vrot.lane.b32.xlu0 %v1402, 32
    %v1435 = vpop.permute.xlu0 %1434
    %1436 = vrot.lane.b32.xlu0 %v1403, 32
    %v1437 = vpop.permute.xlu0 %1436
    %1438 = vrot.lane.b32.xlu0 %v1404, 32
    %v1439 = vpop.permute.xlu0 %1438
    %1440 = vrot.lane.b32.xlu0 %v1405, 32
    %v1441 = vpop.permute.xlu0 %1440
    %1442 = vrot.lane.b32.xlu0 %v1406, 32
    %v1443 = vpop.permute.xlu0 %1442
    %1444 = vrot.lane.b32.xlu0 %v1407, 32
    %v1445 = vpop.permute.xlu0 %1444
    %1446 = vrot.lane.b32.xlu0 %v1408, 32
    %v1447 = vpop.permute.xlu0 %1446
    %1448 = vrot.lane.b32.xlu0 %v1409, 32
    %v1449 = vpop.permute.xlu0 %1448
    %1450 = vrot.lane.b32.xlu0 %v1410, 32
    %v1451 = vpop.permute.xlu0 %1450
    %1452 = vrot.lane.b32.xlu0 %v1411, 32
    %v1453 = vpop.permute.xlu0 %1452
    %1454 = vrot.lane.b32.xlu0 %v1412, 32
    %v1455 = vpop.permute.xlu0 %1454
    %1456 = vrot.lane.b32.xlu0 %v1413, 32
    %v1457 = vpop.permute.xlu0 %1456
    %1458 = vrot.lane.b32.xlu0 %v1414, 32
    %v1459 = vpop.permute.xlu0 %1458
    %1460 = vrot.lane.b32.xlu0 %v1415, 32
    %v1461 = vpop.permute.xlu0 %1460
    %1462 = vrot.lane.b32.xlu0 %v1416, 32
    %v1463 = vpop.permute.xlu0 %1462
    %1464 = vrot.lane.b32.xlu0 %v1417, 32
    %v1465 = vpop.permute.xlu0 %1464
    %v1482 = vmul.f32 %v1371, %v1435
    %v1483 = vmul.f32 %v1373, %v1437
    %v1484 = vmul.f32 %v1375, %v1439
    %v1485 = vmul.f32 %v1377, %v1441
    %v1486 = vmul.f32 %v1379, %v1443
    %v1487 = vmul.f32 %v1381, %v1445
    %v1488 = vmul.f32 %v1383, %v1447
    %v1489 = vmul.f32 %v1385, %v1449
    %v1490 = vmul.f32 %v1387, %v1451
    %v1491 = vmul.f32 %v1389, %v1453
    %v1492 = vmul.f32 %v1391, %v1455
    %v1493 = vmul.f32 %v1393, %v1457
    %v1494 = vmul.f32 %v1395, %v1459
    %v1495 = vmul.f32 %v1397, %v1461
    %v1496 = vmul.f32 %v1399, %v1463
    %v1497 = vmul.f32 %v1401, %v1465
    %1514 = vrot.lane.b32.xlu0 %v1482, 96
    %v1515 = vpop.permute.xlu0 %1514
    %1516 = vrot.lane.b32.xlu0 %v1483, 96
    %v1517 = vpop.permute.xlu0 %1516
    %1518 = vrot.lane.b32.xlu0 %v1484, 96
    %v1519 = vpop.permute.xlu0 %1518
    %1520 = vrot.lane.b32.xlu0 %v1485, 96
    %v1521 = vpop.permute.xlu0 %1520
    %1522 = vrot.lane.b32.xlu0 %v1486, 96
    %v1523 = vpop.permute.xlu0 %1522
    %1524 = vrot.lane.b32.xlu0 %v1487, 96
    %v1525 = vpop.permute.xlu0 %1524
    %1526 = vrot.lane.b32.xlu0 %v1488, 96
    %v1527 = vpop.permute.xlu0 %1526
    %1528 = vrot.lane.b32.xlu0 %v1489, 96
    %v1529 = vpop.permute.xlu0 %1528
    %1530 = vrot.lane.b32.xlu0 %v1490, 96
    %v1531 = vpop.permute.xlu0 %1530
    %1532 = vrot.lane.b32.xlu0 %v1491, 96
    %v1533 = vpop.permute.xlu0 %1532
    %1534 = vrot.lane.b32.xlu0 %v1492, 96
    %v1535 = vpop.permute.xlu0 %1534
    %1536 = vrot.lane.b32.xlu0 %v1493, 96
    %v1537 = vpop.permute.xlu0 %1536
    %1538 = vrot.lane.b32.xlu0 %v1494, 96
    %v1539 = vpop.permute.xlu0 %1538
    %1540 = vrot.lane.b32.xlu0 %v1495, 96
    %v1541 = vpop.permute.xlu0 %1540
    %1542 = vrot.lane.b32.xlu0 %v1496, 96
    %v1543 = vpop.permute.xlu0 %1542
    %1544 = vrot.lane.b32.xlu0 %v1497, 96
    %v1545 = vpop.permute.xlu0 %1544
    %v1562 = vadd.f32 %v1292, %v1515
    %v1563 = vadd.f32 %v1295, %v1517
    %v1564 = vadd.f32 %v1300, %v1519
    %v1565 = vadd.f32 %v1303, %v1521
    %v1566 = vadd.f32 %v1308, %v1523
    %v1567 = vadd.f32 %v1311, %v1525
    %v1568 = vadd.f32 %v1316, %v1527
    %v1569 = vadd.f32 %v1319, %v1529
    %v1570 = vadd.f32 %v1324, %v1531
    %v1571 = vadd.f32 %v1327, %v1533
    %v1572 = vadd.f32 %v1332, %v1535
    %v1573 = vadd.f32 %v1335, %v1537
    %v1574 = vadd.f32 %v1340, %v1539
    %v1575 = vadd.f32 %v1343, %v1541
    %v1576 = vadd.f32 %v1348, %v1543
    %v1577 = vadd.f32 %v1351, %v1545
    %1578 = vrot.lane.b32.xlu0 %v1402, 33
    %v1579 = vpop.permute.xlu0 %1578
    %1580 = vrot.lane.b32.xlu0 %v1403, 33
    %v1581 = vpop.permute.xlu0 %1580
    %1582 = vrot.lane.b32.xlu0 %v1404, 33
    %v1583 = vpop.permute.xlu0 %1582
    %1584 = vrot.lane.b32.xlu0 %v1405, 33
    %v1585 = vpop.permute.xlu0 %1584
    %1586 = vrot.lane.b32.xlu0 %v1406, 33
    %v1587 = vpop.permute.xlu0 %1586
    %1588 = vrot.lane.b32.xlu0 %v1407, 33
    %v1589 = vpop.permute.xlu0 %1588
    %1590 = vrot.lane.b32.xlu0 %v1408, 33
    %v1591 = vpop.permute.xlu0 %1590
    %1592 = vrot.lane.b32.xlu0 %v1409, 33
    %v1593 = vpop.permute.xlu0 %1592
    %1594 = vrot.lane.b32.xlu0 %v1410, 33
    %v1595 = vpop.permute.xlu0 %1594
    %1596 = vrot.lane.b32.xlu0 %v1411, 33
    %v1597 = vpop.permute.xlu0 %1596
    %1598 = vrot.lane.b32.xlu0 %v1412, 33
    %v1599 = vpop.permute.xlu0 %1598
    %1600 = vrot.lane.b32.xlu0 %v1413, 33
    %v1601 = vpop.permute.xlu0 %1600
    %1602 = vrot.lane.b32.xlu0 %v1414, 33
    %v1603 = vpop.permute.xlu0 %1602
    %1604 = vrot.lane.b32.xlu0 %v1415, 33
    %v1605 = vpop.permute.xlu0 %1604
    %1606 = vrot.lane.b32.xlu0 %v1416, 33
    %v1607 = vpop.permute.xlu0 %1606
    %1608 = vrot.lane.b32.xlu0 %v1417, 33
    %v1609 = vpop.permute.xlu0 %1608
    %v1626 = vmul.f32 %v1371, %v1579
    %v1627 = vmul.f32 %v1373, %v1581
    %v1628 = vmul.f32 %v1375, %v1583
    %v1629 = vmul.f32 %v1377, %v1585
    %v1630 = vmul.f32 %v1379, %v1587
    %v1631 = vmul.f32 %v1381, %v1589
    %v1632 = vmul.f32 %v1383, %v1591
    %v1633 = vmul.f32 %v1385, %v1593
    %v1634 = vmul.f32 %v1387, %v1595
    %v1635 = vmul.f32 %v1389, %v1597
    %v1636 = vmul.f32 %v1391, %v1599
    %v1637 = vmul.f32 %v1393, %v1601
    %v1638 = vmul.f32 %v1395, %v1603
    %v1639 = vmul.f32 %v1397, %v1605
    %v1640 = vmul.f32 %v1399, %v1607
    %v1641 = vmul.f32 %v1401, %v1609
    %1658 = vrot.lane.b32.xlu0 %v1626, 127
    %v1659 = vpop.permute.xlu0 %1658
    %1660 = vrot.lane.b32.xlu0 %v1627, 127
    %v1661 = vpop.permute.xlu0 %1660
    %1662 = vrot.lane.b32.xlu0 %v1628, 127
    %v1663 = vpop.permute.xlu0 %1662
    %1664 = vrot.lane.b32.xlu0 %v1629, 127
    %v1665 = vpop.permute.xlu0 %1664
    %1666 = vrot.lane.b32.xlu0 %v1630, 127
    %v1667 = vpop.permute.xlu0 %1666
    %1668 = vrot.lane.b32.xlu0 %v1631, 127
    %v1669 = vpop.permute.xlu0 %1668
    %1670 = vrot.lane.b32.xlu0 %v1632, 127
    %v1671 = vpop.permute.xlu0 %1670
    %1672 = vrot.lane.b32.xlu0 %v1633, 127
    %v1673 = vpop.permute.xlu0 %1672
    %1674 = vrot.lane.b32.xlu0 %v1634, 127
    %v1675 = vpop.permute.xlu0 %1674
    %1676 = vrot.lane.b32.xlu0 %v1635, 127
    %v1677 = vpop.permute.xlu0 %1676
    %1678 = vrot.lane.b32.xlu0 %v1636, 127
    %v1679 = vpop.permute.xlu0 %1678
    %1680 = vrot.lane.b32.xlu0 %v1637, 127
    %v1681 = vpop.permute.xlu0 %1680
    %1682 = vrot.lane.b32.xlu0 %v1638, 127
    %v1683 = vpop.permute.xlu0 %1682
    %1684 = vrot.lane.b32.xlu0 %v1639, 127
    %v1685 = vpop.permute.xlu0 %1684
    %1686 = vrot.lane.b32.xlu0 %v1640, 127
    %v1687 = vpop.permute.xlu0 %1686
    %1688 = vrot.lane.b32.xlu0 %v1641, 127
    %v1689 = vpop.permute.xlu0 %1688
    %v1706 = vadd.f32 %v1292, %v1659
    %v1707 = vadd.f32 %v1295, %v1661
    %v1708 = vadd.f32 %v1300, %v1663
    %v1709 = vadd.f32 %v1303, %v1665
    %v1710 = vadd.f32 %v1308, %v1667
    %v1711 = vadd.f32 %v1311, %v1669
    %v1712 = vadd.f32 %v1316, %v1671
    %v1713 = vadd.f32 %v1319, %v1673
    %v1714 = vadd.f32 %v1324, %v1675
    %v1715 = vadd.f32 %v1327, %v1677
    %v1716 = vadd.f32 %v1332, %v1679
    %v1717 = vadd.f32 %v1335, %v1681
    %v1718 = vadd.f32 %v1340, %v1683
    %v1719 = vadd.f32 %v1343, %v1685
    %v1720 = vadd.f32 %v1348, %v1687
    %v1721 = vadd.f32 %v1351, %v1689
    %v1722 = vld [vmem:[%s0 + $0x240] sm:$0xff]
    %v1723 = vld [vmem:[%s0 + $0x248] sm:$0xff]
    %v1724 = vld [vmem:[%s0 + $0x250] sm:$0xff]
    %v1725 = vld [vmem:[%s0 + $0x258] sm:$0xff]
    %v1726 = vld [vmem:[%s1 + $0x30] sm:$0x3]
    %v1727 = vld [vmem:[%s1 + $0x38] sm:$0x3]
    %v1728 = vpack.c.bf16 %v1563, %v1562
    %v1729 = vpack.c.bf16 %v1565, %v1564
    %v1730 = vpack.c.bf16 %v1567, %v1566
    %v1731 = vpack.c.bf16 %v1569, %v1568
    %v1732 = vpack.c.bf16 %v1571, %v1570
    %v1733 = vpack.c.bf16 %v1573, %v1572
    %v1734 = vpack.c.bf16 %v1575, %v1574
    %v1735 = vpack.c.bf16 %v1577, %v1576
    %v1740 = vunpack.c.l.b16 %v1722
    %v1741 = vunpack.c.h.b16 %v1722
    %v1742 = vunpack.c.l.b16 %v1723
    %v1743 = vunpack.c.h.b16 %v1723
    %v1744 = vunpack.c.l.b16 %v1724
    %v1745 = vunpack.c.h.b16 %v1724
    %v1746 = vunpack.c.l.b16 %v1725
    %v1747 = vunpack.c.h.b16 %v1725
    %v1748 = vpack.c.b16 %v1742, %v1740
    %v1749 = vpack.c.b16 %v1743, %v1741
    %v1750 = vpack.c.b16 %v1746, %v1744
    %v1751 = vpack.c.b16 %v1747, %v1745
    %vm1756 = vcmask 261120
    %v1758 = vsel %vm1756, %v1728, 0
    %v1761 = vsel %vm1756, %v1729, 0
    %v1764 = vsel %vm1756, %v1730, 0
    %v1767 = vsel %vm1756, %v1731, 0
    %v1770 = vsel %vm1756, %v1732, 0
    %v1773 = vsel %vm1756, %v1733, 0
    %v1776 = vsel %vm1756, %v1734, 0
    %v1779 = vsel %vm1756, %v1735, 0
    %1781 = vmatprep.subr.bf16.mxu0 0
    %1782 = vmatpush1.bf16.msra.mxu0 0
    %1783 = vmatprep.subr.bf16.mxu0 0
    %1784 = vmatpush1.bf16.msra.mxu0 0
    %1785 = vmatprep.subr.bf16.mxu0 0
    %1786 = vmatpush1.bf16.msra.mxu0 0
    %1787 = vmatprep.subr.bf16.mxu0 0
    %1788 = vmatpush1.bf16.msra.mxu0 0
    %1789 = vmatprep.subr.bf16.mxu0 0
    %1790 = vmatpush1.bf16.msra.mxu0 0
    %1791 = vmatprep.subr.bf16.mxu0 0
    %1792 = vmatpush1.bf16.msra.mxu0 0
    %1793 = vmatprep.subr.bf16.mxu0 %v1751
    %1794 = vmatpush1.bf16.msra.mxu0 %v1750
    %1795 = vmatprep.subr.bf16.mxu0 %v1749
    %1796 = vmatpush1.bf16.msra.mxu0 %v1748
    %1797 = vmatprep.subr.bf16.mxu0 0
    %1798 = vmatpush2.bf16.msra.mxu0 0
    %1799 = vmatprep.subr.bf16.mxu0 0
    %1800 = vmatpush2.bf16.msra.mxu0 0
    %1801 = vmatprep.subr.bf16.mxu0 0
    %1802 = vmatpush2.bf16.msra.mxu0 0
    %1803 = vmatprep.subr.bf16.mxu0 0
    %1804 = vmatpush2.bf16.msra.mxu0 0
    %1805 = vmatprep.subr.bf16.mxu0 0
    %1806 = vmatpush2.bf16.msra.mxu0 0
    %1807 = vmatprep.subr.bf16.mxu0 0
    %1808 = vmatpush2.bf16.msra.mxu0 0
    %1809 = vmatprep.subr.bf16.mxu0 0
    %1810 = vmatpush2.bf16.msra.mxu0 0
    %1811 = vmatprep.subr.bf16.mxu0 0
    %1812 = vmatpush2.bf16.msra.mxu0 0
    %1813 = vmatprep.mubr.bf16.mxu0 0
    %1814 = vmatmul.mubr.bf16.gmra.mxu0 %v1758
    %v1815 = vpop.f32.mrf.mxu0
    %v1816 = vadd.f32 0.0, %v1815
    %v1817 = vpop.f32.mrf.mxu0
    %v1818 = vadd.f32 0.0, %v1817
    %v1819 = vpop.f32.mrf.mxu0
    %v1820 = vadd.f32 0.0, %v1819
    %v1821 = vpop.f32.mrf.mxu0
    %v1822 = vadd.f32 0.0, %v1821
    %1823 = vmatprep.mubr.bf16.mxu0 0
    %1824 = vmatmul.mubr.bf16.gmra.mxu0 %v1761
    %v1825 = vpop.f32.mrf.mxu0
    %v1826 = vadd.f32 0.0, %v1825
    %v1827 = vpop.f32.mrf.mxu0
    %v1828 = vadd.f32 0.0, %v1827
    %v1829 = vpop.f32.mrf.mxu0
    %v1830 = vadd.f32 0.0, %v1829
    %v1831 = vpop.f32.mrf.mxu0
    %v1832 = vadd.f32 0.0, %v1831
    %1833 = vmatprep.mubr.bf16.mxu0 0
    %1834 = vmatmul.mubr.bf16.gmra.mxu0 %v1764
    %v1835 = vpop.f32.mrf.mxu0
    %v1836 = vadd.f32 0.0, %v1835
    %v1837 = vpop.f32.mrf.mxu0
    %v1838 = vadd.f32 0.0, %v1837
    %v1839 = vpop.f32.mrf.mxu0
    %v1840 = vadd.f32 0.0, %v1839
    %v1841 = vpop.f32.mrf.mxu0
    %v1842 = vadd.f32 0.0, %v1841
    %1843 = vmatprep.mubr.bf16.mxu0 0
    %1844 = vmatmul.mubr.bf16.gmra.mxu0 %v1767
    %v1845 = vpop.f32.mrf.mxu0
    %v1846 = vadd.f32 0.0, %v1845
    %v1847 = vpop.f32.mrf.mxu0
    %v1848 = vadd.f32 0.0, %v1847
    %v1849 = vpop.f32.mrf.mxu0
    %v1850 = vadd.f32 0.0, %v1849
    %v1851 = vpop.f32.mrf.mxu0
    %v1852 = vadd.f32 0.0, %v1851
    %1853 = vmatprep.mubr.bf16.mxu0 0
    %1854 = vmatmul.mubr.bf16.gmra.mxu0 %v1770
    %v1855 = vpop.f32.mrf.mxu0
    %v1856 = vadd.f32 0.0, %v1855
    %v1857 = vpop.f32.mrf.mxu0
    %v1858 = vadd.f32 0.0, %v1857
    %v1859 = vpop.f32.mrf.mxu0
    %v1860 = vadd.f32 0.0, %v1859
    %v1861 = vpop.f32.mrf.mxu0
    %v1862 = vadd.f32 0.0, %v1861
    %1863 = vmatprep.mubr.bf16.mxu0 0
    %1864 = vmatmul.mubr.bf16.gmra.mxu0 %v1773
    %v1865 = vpop.f32.mrf.mxu0
    %v1866 = vadd.f32 0.0, %v1865
    %v1867 = vpop.f32.mrf.mxu0
    %v1868 = vadd.f32 0.0, %v1867
    %v1869 = vpop.f32.mrf.mxu0
    %v1870 = vadd.f32 0.0, %v1869
    %v1871 = vpop.f32.mrf.mxu0
    %v1872 = vadd.f32 0.0, %v1871
    %1873 = vmatprep.mubr.bf16.mxu0 0
    %1874 = vmatmul.mubr.bf16.gmra.mxu0 %v1776
    %v1875 = vpop.f32.mrf.mxu0
    %v1876 = vadd.f32 0.0, %v1875
    %v1877 = vpop.f32.mrf.mxu0
    %v1878 = vadd.f32 0.0, %v1877
    %v1879 = vpop.f32.mrf.mxu0
    %v1880 = vadd.f32 0.0, %v1879
    %v1881 = vpop.f32.mrf.mxu0
    %v1882 = vadd.f32 0.0, %v1881
    %1883 = vmatprep.mubr.bf16.mxu0 0
    %1884 = vmatmul.mubr.bf16.gmra.mxu0 %v1779
    %v1885 = vpop.f32.mrf.mxu0
    %v1886 = vadd.f32 0.0, %v1885
    %v1887 = vpop.f32.mrf.mxu0
    %v1888 = vadd.f32 0.0, %v1887
    %v1889 = vpop.f32.mrf.mxu0
    %v1890 = vadd.f32 0.0, %v1889
    %v1891 = vpop.f32.mrf.mxu0
    %v1892 = vadd.f32 0.0, %v1891
    %1893 = vdwg.mxu0
    %v1894 = vadd.f32 %v1816, %v1820
    %v1895 = vadd.f32 %v1894, %v1826
    %v1896 = vadd.f32 %v1895, %v1830
    %v1897 = vadd.f32 %v1896, %v1836
    %v1898 = vadd.f32 %v1897, %v1840
    %v1899 = vadd.f32 %v1898, %v1846
    %v1900 = vadd.f32 %v1899, %v1850
    %v1901 = vadd.f32 %v1900, %v1856
    %v1902 = vadd.f32 %v1901, %v1860
    %v1903 = vadd.f32 %v1902, %v1866
    %v1904 = vadd.f32 %v1903, %v1870
    %v1905 = vadd.f32 %v1904, %v1876
    %v1906 = vadd.f32 %v1905, %v1880
    %v1907 = vadd.f32 %v1906, %v1886
    %v1908 = vadd.f32 %v1907, %v1890
    %v1909 = vrot.slane %v1908, 4
    %v1910 = vadd.f32 %v1908, %v1909
    %v1911 = vrot.slane %v1910, 2
    %v1912 = vadd.f32 %v1910, %v1911
    %v1913 = vrot.slane %v1912, 1
    %v1914 = vadd.f32 %v1912, %v1913
    %v1915 = vadd.f32 %v1818, %v1822
    %v1916 = vadd.f32 %v1915, %v1828
    %v1917 = vadd.f32 %v1916, %v1832
    %v1918 = vadd.f32 %v1917, %v1838
    %v1919 = vadd.f32 %v1918, %v1842
    %v1920 = vadd.f32 %v1919, %v1848
    %v1921 = vadd.f32 %v1920, %v1852
    %v1922 = vadd.f32 %v1921, %v1858
    %v1923 = vadd.f32 %v1922, %v1862
    %v1924 = vadd.f32 %v1923, %v1868
    %v1925 = vadd.f32 %v1924, %v1872
    %v1926 = vadd.f32 %v1925, %v1878
    %v1927 = vadd.f32 %v1926, %v1882
    %v1928 = vadd.f32 %v1927, %v1888
    %v1929 = vadd.f32 %v1928, %v1892
    %v1930 = vrot.slane %v1929, 4
    %v1931 = vadd.f32 %v1929, %v1930
    %v1932 = vrot.slane %v1931, 2
    %v1933 = vadd.f32 %v1931, %v1932
    %v1934 = vrot.slane %v1933, 1
    %v1935 = vadd.f32 %v1933, %v1934
    %v1936 = vmul.f32 %v1914, %v424
    %v1937 = vmul.f32 %v1935, %v424
    %v1938 = vsub.f32 %v1816, %v1936
    %v1939 = vsub.f32 %v1818, %v1937
    %v1940 = vsub.f32 %v1820, %v1936
    %v1941 = vsub.f32 %v1822, %v1937
    %v1942 = vsub.f32 %v1826, %v1936
    %v1943 = vsub.f32 %v1828, %v1937
    %v1944 = vsub.f32 %v1830, %v1936
    %v1945 = vsub.f32 %v1832, %v1937
    %v1946 = vsub.f32 %v1836, %v1936
    %v1947 = vsub.f32 %v1838, %v1937
    %v1948 = vsub.f32 %v1840, %v1936
    %v1949 = vsub.f32 %v1842, %v1937
    %v1950 = vsub.f32 %v1846, %v1936
    %v1951 = vsub.f32 %v1848, %v1937
    %v1952 = vsub.f32 %v1850, %v1936
    %v1953 = vsub.f32 %v1852, %v1937
    %v1954 = vsub.f32 %v1856, %v1936
    %v1955 = vsub.f32 %v1858, %v1937
    %v1956 = vsub.f32 %v1860, %v1936
    %v1957 = vsub.f32 %v1862, %v1937
    %v1958 = vsub.f32 %v1866, %v1936
    %v1959 = vsub.f32 %v1868, %v1937
    %v1960 = vsub.f32 %v1870, %v1936
    %v1961 = vsub.f32 %v1872, %v1937
    %v1962 = vsub.f32 %v1876, %v1936
    %v1963 = vsub.f32 %v1878, %v1937
    %v1964 = vsub.f32 %v1880, %v1936
    %v1965 = vsub.f32 %v1882, %v1937
    %v1966 = vsub.f32 %v1886, %v1936
    %v1967 = vsub.f32 %v1888, %v1937
    %v1968 = vsub.f32 %v1890, %v1936
    %v1969 = vsub.f32 %v1892, %v1937
    %v1970 = vmul.f32 %v1938, %v1938
    %v1971 = vmul.f32 %v1939, %v1939
    %v1972 = vmul.f32 %v1940, %v1940
    %v1973 = vmul.f32 %v1941, %v1941
    %v1974 = vmul.f32 %v1942, %v1942
    %v1975 = vmul.f32 %v1943, %v1943
    %v1976 = vmul.f32 %v1944, %v1944
    %v1977 = vmul.f32 %v1945, %v1945
    %v1978 = vmul.f32 %v1946, %v1946
    %v1979 = vmul.f32 %v1947, %v1947
    %v1980 = vmul.f32 %v1948, %v1948
    %v1981 = vmul.f32 %v1949, %v1949
    %v1982 = vmul.f32 %v1950, %v1950
    %v1983 = vmul.f32 %v1951, %v1951
    %v1984 = vmul.f32 %v1952, %v1952
    %v1985 = vmul.f32 %v1953, %v1953
    %v1986 = vmul.f32 %v1954, %v1954
    %v1987 = vmul.f32 %v1955, %v1955
    %v1988 = vmul.f32 %v1956, %v1956
    %v1989 = vmul.f32 %v1957, %v1957
    %v1990 = vmul.f32 %v1958, %v1958
    %v1991 = vmul.f32 %v1959, %v1959
    %v1992 = vmul.f32 %v1960, %v1960
    %v1993 = vmul.f32 %v1961, %v1961
    %v1994 = vmul.f32 %v1962, %v1962
    %v1995 = vmul.f32 %v1963, %v1963
    %v1996 = vmul.f32 %v1964, %v1964
    %v1997 = vmul.f32 %v1965, %v1965
    %v1998 = vmul.f32 %v1966, %v1966
    %v1999 = vmul.f32 %v1967, %v1967
    %v2000 = vmul.f32 %v1968, %v1968
    %v2001 = vmul.f32 %v1969, %v1969
    %v2002 = vadd.f32 %v1970, %v1972
    %v2003 = vadd.f32 %v2002, %v1974
    %v2004 = vadd.f32 %v2003, %v1976
    %v2005 = vadd.f32 %v2004, %v1978
    %v2006 = vadd.f32 %v2005, %v1980
    %v2007 = vadd.f32 %v2006, %v1982
    %v2008 = vadd.f32 %v2007, %v1984
    %v2009 = vadd.f32 %v2008, %v1986
    %v2010 = vadd.f32 %v2009, %v1988
    %v2011 = vadd.f32 %v2010, %v1990
    %v2012 = vadd.f32 %v2011, %v1992
    %v2013 = vadd.f32 %v2012, %v1994
    %v2014 = vadd.f32 %v2013, %v1996
    %v2015 = vadd.f32 %v2014, %v1998
    %v2016 = vadd.f32 %v2015, %v2000
    %v2017 = vrot.slane %v2016, 4
    %v2018 = vadd.f32 %v2016, %v2017
    %v2019 = vrot.slane %v2018, 2
    %v2020 = vadd.f32 %v2018, %v2019
    %v2021 = vrot.slane %v2020, 1
    %v2022 = vadd.f32 %v2020, %v2021
    %v2023 = vadd.f32 %v1971, %v1973
    %v2024 = vadd.f32 %v2023, %v1975
    %v2025 = vadd.f32 %v2024, %v1977
    %v2026 = vadd.f32 %v2025, %v1979
    %v2027 = vadd.f32 %v2026, %v1981
    %v2028 = vadd.f32 %v2027, %v1983
    %v2029 = vadd.f32 %v2028, %v1985
    %v2030 = vadd.f32 %v2029, %v1987
    %v2031 = vadd.f32 %v2030, %v1989
    %v2032 = vadd.f32 %v2031, %v1991
    %v2033 = vadd.f32 %v2032, %v1993
    %v2034 = vadd.f32 %v2033, %v1995
    %v2035 = vadd.f32 %v2034, %v1997
    %v2036 = vadd.f32 %v2035, %v1999
    %v2037 = vadd.f32 %v2036, %v2001
    %v2038 = vrot.slane %v2037, 4
    %v2039 = vadd.f32 %v2037, %v2038
    %v2040 = vrot.slane %v2039, 2
    %v2041 = vadd.f32 %v2039, %v2040
    %v2042 = vrot.slane %v2041, 1
    %v2043 = vadd.f32 %v2041, %v2042
    %v2044 = vmul.f32 %v2022, %v424
    %v2045 = vmul.f32 %v2043, %v424
    %v2046 = vadd.f32 %v2044, 0.001
    %v2047 = vadd.f32 %v2045, 0.001
    %v2048 = vrsqrt.pop %v2046
    %v2049 = vrsqrt.pop %v2047
    %v2050 = vmul.f32 %v1938, %v2048
    %v2051 = vmul.f32 %v1939, %v2049
    %v2052 = vmul.f32 %v1940, %v2048
    %v2053 = vmul.f32 %v1941, %v2049
    %v2054 = vmul.f32 %v1942, %v2048
    %v2055 = vmul.f32 %v1943, %v2049
    %v2056 = vmul.f32 %v1944, %v2048
    %v2057 = vmul.f32 %v1945, %v2049
    %v2058 = vmul.f32 %v1946, %v2048
    %v2059 = vmul.f32 %v1947, %v2049
    %v2060 = vmul.f32 %v1948, %v2048
    %v2061 = vmul.f32 %v1949, %v2049
    %v2062 = vmul.f32 %v1950, %v2048
    %v2063 = vmul.f32 %v1951, %v2049
    %v2064 = vmul.f32 %v1952, %v2048
    %v2065 = vmul.f32 %v1953, %v2049
    %v2066 = vmul.f32 %v1954, %v2048
    %v2067 = vmul.f32 %v1955, %v2049
    %v2068 = vmul.f32 %v1956, %v2048
    %v2069 = vmul.f32 %v1957, %v2049
    %v2070 = vmul.f32 %v1958, %v2048
    %v2071 = vmul.f32 %v1959, %v2049
    %v2072 = vmul.f32 %v1960, %v2048
    %v2073 = vmul.f32 %v1961, %v2049
    %v2074 = vmul.f32 %v1962, %v2048
    %v2075 = vmul.f32 %v1963, %v2049
    %v2076 = vmul.f32 %v1964, %v2048
    %v2077 = vmul.f32 %v1965, %v2049
    %v2078 = vmul.f32 %v1966, %v2048
    %v2079 = vmul.f32 %v1967, %v2049
    %v2080 = vmul.f32 %v1968, %v2048
    %v2081 = vmul.f32 %v1969, %v2049
    %v2082 = vlaneseq
    %v2083 = vshrl.u32 %v2082, 7
    %v2084 = vsub.s32 0, %v2083
    %v2085 = vrot.slane %v1726, %v2084
    %v2086 = vlaneseq
    %v2087 = vshrl.u32 %v2086, 7
    %v2088 = vsub.s32 0, %v2087
    %v2089 = vrot.slane %v1727, %v2088
    %v2090 = vmul.f32 %v2050, %v2085
    %v2091 = vmul.f32 %v2051, %v2089
    %v2092 = vmul.f32 %v2052, %v2085
    %v2093 = vmul.f32 %v2053, %v2089
    %v2094 = vmul.f32 %v2054, %v2085
    %v2095 = vmul.f32 %v2055, %v2089
    %v2096 = vmul.f32 %v2056, %v2085
    %v2097 = vmul.f32 %v2057, %v2089
    %v2098 = vmul.f32 %v2058, %v2085
    %v2099 = vmul.f32 %v2059, %v2089
    %v2100 = vmul.f32 %v2060, %v2085
    %v2101 = vmul.f32 %v2061, %v2089
    %v2102 = vmul.f32 %v2062, %v2085
    %v2103 = vmul.f32 %v2063, %v2089
    %v2104 = vmul.f32 %v2064, %v2085
    %v2105 = vmul.f32 %v2065, %v2089
    %v2106 = vmul.f32 %v2066, %v2085
    %v2107 = vmul.f32 %v2067, %v2089
    %v2108 = vmul.f32 %v2068, %v2085
    %v2109 = vmul.f32 %v2069, %v2089
    %v2110 = vmul.f32 %v2070, %v2085
    %v2111 = vmul.f32 %v2071, %v2089
    %v2112 = vmul.f32 %v2072, %v2085
    %v2113 = vmul.f32 %v2073, %v2089
    %v2114 = vmul.f32 %v2074, %v2085
    %v2115 = vmul.f32 %v2075, %v2089
    %v2116 = vmul.f32 %v2076, %v2085
    %v2117 = vmul.f32 %v2077, %v2089
    %v2118 = vmul.f32 %v2078, %v2085
    %v2119 = vmul.f32 %v2079, %v2089
    %v2120 = vmul.f32 %v2080, %v2085
    %v2121 = vmul.f32 %v2081, %v2089
    %v2122 = vlaneseq
    %v2123 = vshrl.u32 %v2122, 7
    %v2124 = vsub.s32 1, %v2123
    %v2125 = vrot.slane %v1726, %v2124
    %v2126 = vlaneseq
    %v2127 = vshrl.u32 %v2126, 7
    %v2128 = vsub.s32 1, %v2127
    %v2129 = vrot.slane %v1727, %v2128
    %v2130 = vadd.f32 %v2090, %v2125
    %v2131 = vadd.f32 %v2091, %v2129
    %v2132 = vadd.f32 %v2092, %v2125
    %v2133 = vadd.f32 %v2093, %v2129
    %v2134 = vadd.f32 %v2094, %v2125
    %v2135 = vadd.f32 %v2095, %v2129
    %v2136 = vadd.f32 %v2096, %v2125
    %v2137 = vadd.f32 %v2097, %v2129
    %v2138 = vadd.f32 %v2098, %v2125
    %v2139 = vadd.f32 %v2099, %v2129
    %v2140 = vadd.f32 %v2100, %v2125
    %v2141 = vadd.f32 %v2101, %v2129
    %v2142 = vadd.f32 %v2102, %v2125
    %v2143 = vadd.f32 %v2103, %v2129
    %v2144 = vadd.f32 %v2104, %v2125
    %v2145 = vadd.f32 %v2105, %v2129
    %v2146 = vadd.f32 %v2106, %v2125
    %v2147 = vadd.f32 %v2107, %v2129
    %v2148 = vadd.f32 %v2108, %v2125
    %v2149 = vadd.f32 %v2109, %v2129
    %v2150 = vadd.f32 %v2110, %v2125
    %v2151 = vadd.f32 %v2111, %v2129
    %v2152 = vadd.f32 %v2112, %v2125
    %v2153 = vadd.f32 %v2113, %v2129
    %v2154 = vadd.f32 %v2114, %v2125
    %v2155 = vadd.f32 %v2115, %v2129
    %v2156 = vadd.f32 %v2116, %v2125
    %v2157 = vadd.f32 %v2117, %v2129
    %v2158 = vadd.f32 %v2118, %v2125
    %v2159 = vadd.f32 %v2119, %v2129
    %v2160 = vadd.f32 %v2120, %v2125
    %v2161 = vadd.f32 %v2121, %v2129
    %v2162 = vmax.f32 %v2130, %v2131
    %2163 = vmax.xlane.f32.xlu0 %v2162
    %v2164 = vpop.xlane.xlu0 %2163
    %v2165 = vmax.f32 %v2132, %v2133
    %2166 = vmax.xlane.f32.xlu0 %v2165
    %v2167 = vpop.xlane.xlu0 %2166
    %v2168 = vmax.f32 %v2134, %v2135
    %2169 = vmax.xlane.f32.xlu0 %v2168
    %v2170 = vpop.xlane.xlu0 %2169
    %v2171 = vmax.f32 %v2136, %v2137
    %2172 = vmax.xlane.f32.xlu0 %v2171
    %v2173 = vpop.xlane.xlu0 %2172
    %v2174 = vmax.f32 %v2138, %v2139
    %2175 = vmax.xlane.f32.xlu0 %v2174
    %v2176 = vpop.xlane.xlu0 %2175
    %v2177 = vmax.f32 %v2140, %v2141
    %2178 = vmax.xlane.f32.xlu0 %v2177
    %v2179 = vpop.xlane.xlu0 %2178
    %v2180 = vmax.f32 %v2142, %v2143
    %2181 = vmax.xlane.f32.xlu0 %v2180
    %v2182 = vpop.xlane.xlu0 %2181
    %v2183 = vmax.f32 %v2144, %v2145
    %2184 = vmax.xlane.f32.xlu0 %v2183
    %v2185 = vpop.xlane.xlu0 %2184
    %v2186 = vmax.f32 %v2146, %v2147
    %2187 = vmax.xlane.f32.xlu0 %v2186
    %v2188 = vpop.xlane.xlu0 %2187
    %v2189 = vmax.f32 %v2148, %v2149
    %2190 = vmax.xlane.f32.xlu0 %v2189
    %v2191 = vpop.xlane.xlu0 %2190
    %v2192 = vmax.f32 %v2150, %v2151
    %2193 = vmax.xlane.f32.xlu0 %v2192
    %v2194 = vpop.xlane.xlu0 %2193
    %v2195 = vmax.f32 %v2152, %v2153
    %2196 = vmax.xlane.f32.xlu0 %v2195
    %v2197 = vpop.xlane.xlu0 %2196
    %v2198 = vmax.f32 %v2154, %v2155
    %2199 = vmax.xlane.f32.xlu0 %v2198
    %v2200 = vpop.xlane.xlu0 %2199
    %v2201 = vmax.f32 %v2156, %v2157
    %2202 = vmax.xlane.f32.xlu0 %v2201
    %v2203 = vpop.xlane.xlu0 %2202
    %v2204 = vmax.f32 %v2158, %v2159
    %2205 = vmax.xlane.f32.xlu0 %v2204
    %v2206 = vpop.xlane.xlu0 %2205
    %v2207 = vmax.f32 %v2160, %v2161
    %2208 = vmax.xlane.f32.xlu0 %v2207
    %v2209 = vpop.xlane.xlu0 %2208
    %v2210 = vsub.f32 %v2130, %v2164
    %v2211 = vsub.f32 %v2131, %v2164
    %v2212 = vsub.f32 %v2132, %v2167
    %v2213 = vsub.f32 %v2133, %v2167
    %v2214 = vsub.f32 %v2134, %v2170
    %v2215 = vsub.f32 %v2135, %v2170
    %v2216 = vsub.f32 %v2136, %v2173
    %v2217 = vsub.f32 %v2137, %v2173
    %v2218 = vsub.f32 %v2138, %v2176
    %v2219 = vsub.f32 %v2139, %v2176
    %v2220 = vsub.f32 %v2140, %v2179
    %v2221 = vsub.f32 %v2141, %v2179
    %v2222 = vsub.f32 %v2142, %v2182
    %v2223 = vsub.f32 %v2143, %v2182
    %v2224 = vsub.f32 %v2144, %v2185
    %v2225 = vsub.f32 %v2145, %v2185
    %v2226 = vsub.f32 %v2146, %v2188
    %v2227 = vsub.f32 %v2147, %v2188
    %v2228 = vsub.f32 %v2148, %v2191
    %v2229 = vsub.f32 %v2149, %v2191
    %v2230 = vsub.f32 %v2150, %v2194
    %v2231 = vsub.f32 %v2151, %v2194
    %v2232 = vsub.f32 %v2152, %v2197
    %v2233 = vsub.f32 %v2153, %v2197
    %v2234 = vsub.f32 %v2154, %v2200
    %v2235 = vsub.f32 %v2155, %v2200
    %v2236 = vsub.f32 %v2156, %v2203
    %v2237 = vsub.f32 %v2157, %v2203
    %v2238 = vsub.f32 %v2158, %v2206
    %v2239 = vsub.f32 %v2159, %v2206
    %v2240 = vsub.f32 %v2160, %v2209
    %v2241 = vsub.f32 %v2161, %v2209
    %v2242 = vmul.f32 %v2210, 1.442695
    %v2243 = vpow.pop %v2242
    %v2244 = vmul.f32 %v2211, 1.442695
    %v2245 = vpow.pop %v2244
    %v2246 = vmul.f32 %v2212, 1.442695
    %v2247 = vpow.pop %v2246
    %v2248 = vmul.f32 %v2213, 1.442695
    %v2249 = vpow.pop %v2248
    %v2250 = vmul.f32 %v2214, 1.442695
    %v2251 = vpow.pop %v2250
    %v2252 = vmul.f32 %v2215, 1.442695
    %v2253 = vpow.pop %v2252
    %v2254 = vmul.f32 %v2216, 1.442695
    %v2255 = vpow.pop %v2254
    %v2256 = vmul.f32 %v2217, 1.442695
    %v2257 = vpow.pop %v2256
    %v2258 = vmul.f32 %v2218, 1.442695
    %v2259 = vpow.pop %v2258
    %v2260 = vmul.f32 %v2219, 1.442695
    %v2261 = vpow.pop %v2260
    %v2262 = vmul.f32 %v2220, 1.442695
    %v2263 = vpow.pop %v2262
    %v2264 = vmul.f32 %v2221, 1.442695
    %v2265 = vpow.pop %v2264
    %v2266 = vmul.f32 %v2222, 1.442695
    %v2267 = vpow.pop %v2266
    %v2268 = vmul.f32 %v2223, 1.442695
    %v2269 = vpow.pop %v2268
    %v2270 = vmul.f32 %v2224, 1.442695
    %v2271 = vpow.pop %v2270
    %v2272 = vmul.f32 %v2225, 1.442695
    %v2273 = vpow.pop %v2272
    %v2274 = vmul.f32 %v2226, 1.442695
    %v2275 = vpow.pop %v2274
    %v2276 = vmul.f32 %v2227, 1.442695
    %v2277 = vpow.pop %v2276
    %v2278 = vmul.f32 %v2228, 1.442695
    %v2279 = vpow.pop %v2278
    %v2280 = vmul.f32 %v2229, 1.442695
    %v2281 = vpow.pop %v2280
    %v2282 = vmul.f32 %v2230, 1.442695
    %v2283 = vpow.pop %v2282
    %v2284 = vmul.f32 %v2231, 1.442695
    %v2285 = vpow.pop %v2284
    %v2286 = vmul.f32 %v2232, 1.442695
    %v2287 = vpow.pop %v2286
    %v2288 = vmul.f32 %v2233, 1.442695
    %v2289 = vpow.pop %v2288
    %v2290 = vmul.f32 %v2234, 1.442695
    %v2291 = vpow.pop %v2290
    %v2292 = vmul.f32 %v2235, 1.442695
    %v2293 = vpow.pop %v2292
    %v2294 = vmul.f32 %v2236, 1.442695
    %v2295 = vpow.pop %v2294
    %v2296 = vmul.f32 %v2237, 1.442695
    %v2297 = vpow.pop %v2296
    %v2298 = vmul.f32 %v2238, 1.442695
    %v2299 = vpow.pop %v2298
    %v2300 = vmul.f32 %v2239, 1.442695
    %v2301 = vpow.pop %v2300
    %v2302 = vmul.f32 %v2240, 1.442695
    %v2303 = vpow.pop %v2302
    %v2304 = vmul.f32 %v2241, 1.442695
    %v2305 = vpow.pop %v2304
    %v2306 = vadd.f32 %v2243, %v2245
    %2307 = vadd.xlane.f32.xlu0 %v2306
    %v2308 = vpop.xlane.xlu0 %2307
    %v2309 = vadd.f32 %v2247, %v2249
    %2310 = vadd.xlane.f32.xlu0 %v2309
    %v2311 = vpop.xlane.xlu0 %2310
    %v2312 = vadd.f32 %v2251, %v2253
    %2313 = vadd.xlane.f32.xlu0 %v2312
    %v2314 = vpop.xlane.xlu0 %2313
    %v2315 = vadd.f32 %v2255, %v2257
    %2316 = vadd.xlane.f32.xlu0 %v2315
    %v2317 = vpop.xlane.xlu0 %2316
    %v2318 = vadd.f32 %v2259, %v2261
    %2319 = vadd.xlane.f32.xlu0 %v2318
    %v2320 = vpop.xlane.xlu0 %2319
    %v2321 = vadd.f32 %v2263, %v2265
    %2322 = vadd.xlane.f32.xlu0 %v2321
    %v2323 = vpop.xlane.xlu0 %2322
    %v2324 = vadd.f32 %v2267, %v2269
    %2325 = vadd.xlane.f32.xlu0 %v2324
    %v2326 = vpop.xlane.xlu0 %2325
    %v2327 = vadd.f32 %v2271, %v2273
    %2328 = vadd.xlane.f32.xlu0 %v2327
    %v2329 = vpop.xlane.xlu0 %2328
    %v2330 = vadd.f32 %v2275, %v2277
    %2331 = vadd.xlane.f32.xlu0 %v2330
    %v2332 = vpop.xlane.xlu0 %2331
    %v2333 = vadd.f32 %v2279, %v2281
    %2334 = vadd.xlane.f32.xlu0 %v2333
    %v2335 = vpop.xlane.xlu0 %2334
    %v2336 = vadd.f32 %v2283, %v2285
    %2337 = vadd.xlane.f32.xlu0 %v2336
    %v2338 = vpop.xlane.xlu0 %2337
    %v2339 = vadd.f32 %v2287, %v2289
    %2340 = vadd.xlane.f32.xlu0 %v2339
    %v2341 = vpop.xlane.xlu0 %2340
    %v2342 = vadd.f32 %v2291, %v2293
    %2343 = vadd.xlane.f32.xlu0 %v2342
    %v2344 = vpop.xlane.xlu0 %2343
    %v2345 = vadd.f32 %v2295, %v2297
    %2346 = vadd.xlane.f32.xlu0 %v2345
    %v2347 = vpop.xlane.xlu0 %2346
    %v2348 = vadd.f32 %v2299, %v2301
    %2349 = vadd.xlane.f32.xlu0 %v2348
    %v2350 = vpop.xlane.xlu0 %2349
    %v2351 = vadd.f32 %v2303, %v2305
    %2352 = vadd.xlane.f32.xlu0 %v2351
    %v2353 = vpop.xlane.xlu0 %2352
    %v2354 = vrcp.pop %v2308
    %v2355 = vrcp.pop %v2311
    %v2356 = vrcp.pop %v2314
    %v2357 = vrcp.pop %v2317
    %v2358 = vrcp.pop %v2320
    %v2359 = vrcp.pop %v2323
    %v2360 = vrcp.pop %v2326
    %v2361 = vrcp.pop %v2329
    %v2362 = vrcp.pop %v2332
    %v2363 = vrcp.pop %v2335
    %v2364 = vrcp.pop %v2338
    %v2365 = vrcp.pop %v2341
    %v2366 = vrcp.pop %v2344
    %v2367 = vrcp.pop %v2347
    %v2368 = vrcp.pop %v2350
    %v2369 = vrcp.pop %v2353
    %v2370 = vmul.f32 %v2308, %v2354
    %v2371 = vmul.f32 %v2311, %v2355
    %v2372 = vmul.f32 %v2314, %v2356
    %v2373 = vmul.f32 %v2317, %v2357
    %v2374 = vmul.f32 %v2320, %v2358
    %v2375 = vmul.f32 %v2323, %v2359
    %v2376 = vmul.f32 %v2326, %v2360
    %v2377 = vmul.f32 %v2329, %v2361
    %v2378 = vmul.f32 %v2332, %v2362
    %v2379 = vmul.f32 %v2335, %v2363
    %v2380 = vmul.f32 %v2338, %v2364
    %v2381 = vmul.f32 %v2341, %v2365
    %v2382 = vmul.f32 %v2344, %v2366
    %v2383 = vmul.f32 %v2347, %v2367
    %v2384 = vmul.f32 %v2350, %v2368
    %v2385 = vmul.f32 %v2353, %v2369
    %v2386 = vsub.f32 2.0, %v2370
    %v2387 = vsub.f32 2.0, %v2371
    %v2388 = vsub.f32 2.0, %v2372
    %v2389 = vsub.f32 2.0, %v2373
    %v2390 = vsub.f32 2.0, %v2374
    %v2391 = vsub.f32 2.0, %v2375
    %v2392 = vsub.f32 2.0, %v2376
    %v2393 = vsub.f32 2.0, %v2377
    %v2394 = vsub.f32 2.0, %v2378
    %v2395 = vsub.f32 2.0, %v2379
    %v2396 = vsub.f32 2.0, %v2380
    %v2397 = vsub.f32 2.0, %v2381
    %v2398 = vsub.f32 2.0, %v2382
    %v2399 = vsub.f32 2.0, %v2383
    %v2400 = vsub.f32 2.0, %v2384
    %v2401 = vsub.f32 2.0, %v2385
    %v2402 = vmul.f32 %v2354, %v2386
    %v2403 = vmul.f32 %v2355, %v2387
    %v2404 = vmul.f32 %v2356, %v2388
    %v2405 = vmul.f32 %v2357, %v2389
    %v2406 = vmul.f32 %v2358, %v2390
    %v2407 = vmul.f32 %v2359, %v2391
    %v2408 = vmul.f32 %v2360, %v2392
    %v2409 = vmul.f32 %v2361, %v2393
    %v2410 = vmul.f32 %v2362, %v2394
    %v2411 = vmul.f32 %v2363, %v2395
    %v2412 = vmul.f32 %v2364, %v2396
    %v2413 = vmul.f32 %v2365, %v2397
    %v2414 = vmul.f32 %v2366, %v2398
    %v2415 = vmul.f32 %v2367, %v2399
    %v2416 = vmul.f32 %v2368, %v2400
    %v2417 = vmul.f32 %v2369, %v2401
    %v2418 = vmul.f32 %v2243, %v2402
    %v2419 = vmul.f32 %v2245, %v2402
    %v2420 = vmul.f32 %v2247, %v2403
    %v2421 = vmul.f32 %v2249, %v2403
    %v2422 = vmul.f32 %v2251, %v2404
    %v2423 = vmul.f32 %v2253, %v2404
    %v2424 = vmul.f32 %v2255, %v2405
    %v2425 = vmul.f32 %v2257, %v2405
    %v2426 = vmul.f32 %v2259, %v2406
    %v2427 = vmul.f32 %v2261, %v2406
    %v2428 = vmul.f32 %v2263, %v2407
    %v2429 = vmul.f32 %v2265, %v2407
    %v2430 = vmul.f32 %v2267, %v2408
    %v2431 = vmul.f32 %v2269, %v2408
    %v2432 = vmul.f32 %v2271, %v2409
    %v2433 = vmul.f32 %v2273, %v2409
    %v2434 = vmul.f32 %v2275, %v2410
    %v2435 = vmul.f32 %v2277, %v2410
    %v2436 = vmul.f32 %v2279, %v2411
    %v2437 = vmul.f32 %v2281, %v2411
    %v2438 = vmul.f32 %v2283, %v2412
    %v2439 = vmul.f32 %v2285, %v2412
    %v2440 = vmul.f32 %v2287, %v2413
    %v2441 = vmul.f32 %v2289, %v2413
    %v2442 = vmul.f32 %v2291, %v2414
    %v2443 = vmul.f32 %v2293, %v2414
    %v2444 = vmul.f32 %v2295, %v2415
    %v2445 = vmul.f32 %v2297, %v2415
    %v2446 = vmul.f32 %v2299, %v2416
    %v2447 = vmul.f32 %v2301, %v2416
    %v2448 = vmul.f32 %v2303, %v2417
    %v2449 = vmul.f32 %v2305, %v2417
    %v2450 = vmin.f32 %v1706, 10.0
    %v2451 = vmin.f32 %v1707, 10.0
    %v2452 = vmin.f32 %v1708, 10.0
    %v2453 = vmin.f32 %v1709, 10.0
    %v2454 = vmin.f32 %v1710, 10.0
    %v2455 = vmin.f32 %v1711, 10.0
    %v2456 = vmin.f32 %v1712, 10.0
    %v2457 = vmin.f32 %v1713, 10.0
    %v2458 = vmin.f32 %v1714, 10.0
    %v2459 = vmin.f32 %v1715, 10.0
    %v2460 = vmin.f32 %v1716, 10.0
    %v2461 = vmin.f32 %v1717, 10.0
    %v2462 = vmin.f32 %v1718, 10.0
    %v2463 = vmin.f32 %v1719, 10.0
    %v2464 = vmin.f32 %v1720, 10.0
    %v2465 = vmin.f32 %v1721, 10.0
    %v2466 = vmul.f32 %v2450, 1.442695
    %v2467 = vpow.pop %v2466
    %v2468 = vmul.f32 %v2451, 1.442695
    %v2469 = vpow.pop %v2468
    %v2470 = vmul.f32 %v2452, 1.442695
    %v2471 = vpow.pop %v2470
    %v2472 = vmul.f32 %v2453, 1.442695
    %v2473 = vpow.pop %v2472
    %v2474 = vmul.f32 %v2454, 1.442695
    %v2475 = vpow.pop %v2474
    %v2476 = vmul.f32 %v2455, 1.442695
    %v2477 = vpow.pop %v2476
    %v2478 = vmul.f32 %v2456, 1.442695
    %v2479 = vpow.pop %v2478
    %v2480 = vmul.f32 %v2457, 1.442695
    %v2481 = vpow.pop %v2480
    %v2482 = vmul.f32 %v2458, 1.442695
    %v2483 = vpow.pop %v2482
    %v2484 = vmul.f32 %v2459, 1.442695
    %v2485 = vpow.pop %v2484
    %v2486 = vmul.f32 %v2460, 1.442695
    %v2487 = vpow.pop %v2486
    %v2488 = vmul.f32 %v2461, 1.442695
    %v2489 = vpow.pop %v2488
    %v2490 = vmul.f32 %v2462, 1.442695
    %v2491 = vpow.pop %v2490
    %v2492 = vmul.f32 %v2463, 1.442695
    %v2493 = vpow.pop %v2492
    %v2494 = vmul.f32 %v2464, 1.442695
    %v2495 = vpow.pop %v2494
    %v2496 = vmul.f32 %v2465, 1.442695
    %v2497 = vpow.pop %v2496
    %2499 = vset.pattern.permute.xlu0 64
    %2500 = vperm.xlu0 %2499, %v2467
    %v2501 = vpop.permute.xlu0 %2500
    %2504 = vset.pattern.permute.xlu0 64
    %2505 = vperm.xlu0 %2504, %v2469
    %v2506 = vpop.permute.xlu0 %2505
    %2509 = vset.pattern.permute.xlu0 64
    %2510 = vperm.xlu0 %2509, %v2471
    %v2511 = vpop.permute.xlu0 %2510
    %2514 = vset.pattern.permute.xlu0 64
    %2515 = vperm.xlu0 %2514, %v2473
    %v2516 = vpop.permute.xlu0 %2515
    %2519 = vset.pattern.permute.xlu0 64
    %2520 = vperm.xlu0 %2519, %v2475
    %v2521 = vpop.permute.xlu0 %2520
    %2524 = vset.pattern.permute.xlu0 64
    %2525 = vperm.xlu0 %2524, %v2477
    %v2526 = vpop.permute.xlu0 %2525
    %2529 = vset.pattern.permute.xlu0 64
    %2530 = vperm.xlu0 %2529, %v2479
    %v2531 = vpop.permute.xlu0 %2530
    %2534 = vset.pattern.permute.xlu0 64
    %2535 = vperm.xlu0 %2534, %v2481
    %v2536 = vpop.permute.xlu0 %2535
    %2539 = vset.pattern.permute.xlu0 64
    %2540 = vperm.xlu0 %2539, %v2483
    %v2541 = vpop.permute.xlu0 %2540
    %2544 = vset.pattern.permute.xlu0 64
    %2545 = vperm.xlu0 %2544, %v2485
    %v2546 = vpop.permute.xlu0 %2545
    %2549 = vset.pattern.permute.xlu0 64
    %2550 = vperm.xlu0 %2549, %v2487
    %v2551 = vpop.permute.xlu0 %2550
    %2554 = vset.pattern.permute.xlu0 64
    %2555 = vperm.xlu0 %2554, %v2489
    %v2556 = vpop.permute.xlu0 %2555
    %2559 = vset.pattern.permute.xlu0 64
    %2560 = vperm.xlu0 %2559, %v2491
    %v2561 = vpop.permute.xlu0 %2560
    %2564 = vset.pattern.permute.xlu0 64
    %2565 = vperm.xlu0 %2564, %v2493
    %v2566 = vpop.permute.xlu0 %2565
    %2569 = vset.pattern.permute.xlu0 64
    %2570 = vperm.xlu0 %2569, %v2495
    %v2571 = vpop.permute.xlu0 %2570
    %2574 = vset.pattern.permute.xlu0 64
    %2575 = vperm.xlu0 %2574, %v2497
    %v2576 = vpop.permute.xlu0 %2575
    %v2578 = vmul.f32 %v2501, %v2418
    %v2579 = vmul.f32 %v2501, %v2419
    %v2580 = vmul.f32 %v2506, %v2420
    %v2581 = vmul.f32 %v2506, %v2421
    %v2582 = vmul.f32 %v2511, %v2422
    %v2583 = vmul.f32 %v2511, %v2423
    %v2584 = vmul.f32 %v2516, %v2424
    %v2585 = vmul.f32 %v2516, %v2425
    %v2586 = vmul.f32 %v2521, %v2426
    %v2587 = vmul.f32 %v2521, %v2427
    %v2588 = vmul.f32 %v2526, %v2428
    %v2589 = vmul.f32 %v2526, %v2429
    %v2590 = vmul.f32 %v2531, %v2430
    %v2591 = vmul.f32 %v2531, %v2431
    %v2592 = vmul.f32 %v2536, %v2432
    %v2593 = vmul.f32 %v2536, %v2433
    %v2594 = vmul.f32 %v2541, %v2434
    %v2595 = vmul.f32 %v2541, %v2435
    %v2596 = vmul.f32 %v2546, %v2436
    %v2597 = vmul.f32 %v2546, %v2437
    %v2598 = vmul.f32 %v2551, %v2438
    %v2599 = vmul.f32 %v2551, %v2439
    %v2600 = vmul.f32 %v2556, %v2440
    %v2601 = vmul.f32 %v2556, %v2441
    %v2602 = vmul.f32 %v2561, %v2442
    %v2603 = vmul.f32 %v2561, %v2443
    %v2604 = vmul.f32 %v2566, %v2444
    %v2605 = vmul.f32 %v2566, %v2445
    %v2606 = vmul.f32 %v2571, %v2446
    %v2607 = vmul.f32 %v2571, %v2447
    %v2608 = vmul.f32 %v2576, %v2448
    %v2609 = vmul.f32 %v2576, %v2449
    %2626 = vrot.lane.b32.xlu0 %v1562, 64
    %v2627 = vpop.permute.xlu0 %2626
    %2628 = vrot.lane.b32.xlu0 %v1563, 64
    %v2629 = vpop.permute.xlu0 %2628
    %2630 = vrot.lane.b32.xlu0 %v1564, 64
    %v2631 = vpop.permute.xlu0 %2630
    %2632 = vrot.lane.b32.xlu0 %v1565, 64
    %v2633 = vpop.permute.xlu0 %2632
    %2634 = vrot.lane.b32.xlu0 %v1566, 64
    %v2635 = vpop.permute.xlu0 %2634
    %2636 = vrot.lane.b32.xlu0 %v1567, 64
    %v2637 = vpop.permute.xlu0 %2636
    %2638 = vrot.lane.b32.xlu0 %v1568, 64
    %v2639 = vpop.permute.xlu0 %2638
    %2640 = vrot.lane.b32.xlu0 %v1569, 64
    %v2641 = vpop.permute.xlu0 %2640
    %2642 = vrot.lane.b32.xlu0 %v1570, 64
    %v2643 = vpop.permute.xlu0 %2642
    %2644 = vrot.lane.b32.xlu0 %v1571, 64
    %v2645 = vpop.permute.xlu0 %2644
    %2646 = vrot.lane.b32.xlu0 %v1572, 64
    %v2647 = vpop.permute.xlu0 %2646
    %2648 = vrot.lane.b32.xlu0 %v1573, 64
    %v2649 = vpop.permute.xlu0 %2648
    %2650 = vrot.lane.b32.xlu0 %v1574, 64
    %v2651 = vpop.permute.xlu0 %2650
    %2652 = vrot.lane.b32.xlu0 %v1575, 64
    %v2653 = vpop.permute.xlu0 %2652
    %2654 = vrot.lane.b32.xlu0 %v1576, 64
    %v2655 = vpop.permute.xlu0 %2654
    %2656 = vrot.lane.b32.xlu0 %v1577, 64
    %v2657 = vpop.permute.xlu0 %2656
    %2690 = vrot.lane.b32.xlu0 %v1292, 32
    %v2691 = vpop.permute.xlu0 %2690
    %2692 = vrot.lane.b32.xlu0 %v1295, 32
    %v2693 = vpop.permute.xlu0 %2692
    %2694 = vrot.lane.b32.xlu0 %v1300, 32
    %v2695 = vpop.permute.xlu0 %2694
    %2696 = vrot.lane.b32.xlu0 %v1303, 32
    %v2697 = vpop.permute.xlu0 %2696
    %2698 = vrot.lane.b32.xlu0 %v1308, 32
    %v2699 = vpop.permute.xlu0 %2698
    %2700 = vrot.lane.b32.xlu0 %v1311, 32
    %v2701 = vpop.permute.xlu0 %2700
    %2702 = vrot.lane.b32.xlu0 %v1316, 32
    %v2703 = vpop.permute.xlu0 %2702
    %2704 = vrot.lane.b32.xlu0 %v1319, 32
    %v2705 = vpop.permute.xlu0 %2704
    %2706 = vrot.lane.b32.xlu0 %v1324, 32
    %v2707 = vpop.permute.xlu0 %2706
    %2708 = vrot.lane.b32.xlu0 %v1327, 32
    %v2709 = vpop.permute.xlu0 %2708
    %2710 = vrot.lane.b32.xlu0 %v1332, 32
    %v2711 = vpop.permute.xlu0 %2710
    %2712 = vrot.lane.b32.xlu0 %v1335, 32
    %v2713 = vpop.permute.xlu0 %2712
    %2714 = vrot.lane.b32.xlu0 %v1340, 32
    %v2715 = vpop.permute.xlu0 %2714
    %2716 = vrot.lane.b32.xlu0 %v1343, 32
    %v2717 = vpop.permute.xlu0 %2716
    %2718 = vrot.lane.b32.xlu0 %v1348, 32
    %v2719 = vpop.permute.xlu0 %2718
    %2720 = vrot.lane.b32.xlu0 %v1351, 32
    %v2721 = vpop.permute.xlu0 %2720
    %2754 = vrot.lane.b32.xlu0 %v1371, 32
    %v2755 = vpop.permute.xlu0 %2754
    %2756 = vrot.lane.b32.xlu0 %v1373, 32
    %v2757 = vpop.permute.xlu0 %2756
    %2758 = vrot.lane.b32.xlu0 %v1375, 32
    %v2759 = vpop.permute.xlu0 %2758
    %2760 = vrot.lane.b32.xlu0 %v1377, 32
    %v2761 = vpop.permute.xlu0 %2760
    %2762 = vrot.lane.b32.xlu0 %v1379, 32
    %v2763 = vpop.permute.xlu0 %2762
    %2764 = vrot.lane.b32.xlu0 %v1381, 32
    %v2765 = vpop.permute.xlu0 %2764
    %2766 = vrot.lane.b32.xlu0 %v1383, 32
    %v2767 = vpop.permute.xlu0 %2766
    %2768 = vrot.lane.b32.xlu0 %v1385, 32
    %v2769 = vpop.permute.xlu0 %2768
    %2770 = vrot.lane.b32.xlu0 %v1387, 32
    %v2771 = vpop.permute.xlu0 %2770
    %2772 = vrot.lane.b32.xlu0 %v1389, 32
    %v2773 = vpop.permute.xlu0 %2772
    %2774 = vrot.lane.b32.xlu0 %v1391, 32
    %v2775 = vpop.permute.xlu0 %2774
    %2776 = vrot.lane.b32.xlu0 %v1393, 32
    %v2777 = vpop.permute.xlu0 %2776
    %2778 = vrot.lane.b32.xlu0 %v1395, 32
    %v2779 = vpop.permute.xlu0 %2778
    %2780 = vrot.lane.b32.xlu0 %v1397, 32
    %v2781 = vpop.permute.xlu0 %2780
    %2782 = vrot.lane.b32.xlu0 %v1399, 32
    %v2783 = vpop.permute.xlu0 %2782
    %2784 = vrot.lane.b32.xlu0 %v1401, 32
    %v2785 = vpop.permute.xlu0 %2784
    %2818 = vrot.lane.b32.xlu0 %v1706, 34
    %v2819 = vpop.permute.xlu0 %2818
    %2820 = vrot.lane.b32.xlu0 %v1707, 34
    %v2821 = vpop.permute.xlu0 %2820
    %2822 = vrot.lane.b32.xlu0 %v1708, 34
    %v2823 = vpop.permute.xlu0 %2822
    %2824 = vrot.lane.b32.xlu0 %v1709, 34
    %v2825 = vpop.permute.xlu0 %2824
    %2826 = vrot.lane.b32.xlu0 %v1710, 34
    %v2827 = vpop.permute.xlu0 %2826
    %2828 = vrot.lane.b32.xlu0 %v1711, 34
    %v2829 = vpop.permute.xlu0 %2828
    %2830 = vrot.lane.b32.xlu0 %v1712, 34
    %v2831 = vpop.permute.xlu0 %2830
    %2832 = vrot.lane.b32.xlu0 %v1713, 34
    %v2833 = vpop.permute.xlu0 %2832
    %2834 = vrot.lane.b32.xlu0 %v1714, 34
    %v2835 = vpop.permute.xlu0 %2834
    %2836 = vrot.lane.b32.xlu0 %v1715, 34
    %v2837 = vpop.permute.xlu0 %2836
    %2838 = vrot.lane.b32.xlu0 %v1716, 34
    %v2839 = vpop.permute.xlu0 %2838
    %2840 = vrot.lane.b32.xlu0 %v1717, 34
    %v2841 = vpop.permute.xlu0 %2840
    %2842 = vrot.lane.b32.xlu0 %v1718, 34
    %v2843 = vpop.permute.xlu0 %2842
    %2844 = vrot.lane.b32.xlu0 %v1719, 34
    %v2845 = vpop.permute.xlu0 %2844
    %2846 = vrot.lane.b32.xlu0 %v1720, 34
    %v2847 = vpop.permute.xlu0 %2846
    %2848 = vrot.lane.b32.xlu0 %v1721, 34
    %v2849 = vpop.permute.xlu0 %2848
    %v2866 = vsel %vm1756, %v1292, %v1371
    %v2867 = vsel %vm1756, %v1295, %v1373
    %v2868 = vsel %vm1756, %v1300, %v1375
    %v2869 = vsel %vm1756, %v1303, %v1377
    %v2870 = vsel %vm1756, %v1308, %v1379
    %v2871 = vsel %vm1756, %v1311, %v1381
    %v2872 = vsel %vm1756, %v1316, %v1383
    %v2873 = vsel %vm1756, %v1319, %v1385
    %v2874 = vsel %vm1756, %v1324, %v1387
    %v2875 = vsel %vm1756, %v1327, %v1389
    %v2876 = vsel %vm1756, %v1332, %v1391
    %v2877 = vsel %vm1756, %v1335, %v1393
    %v2878 = vsel %vm1756, %v1340, %v1395
    %v2879 = vsel %vm1756, %v1343, %v1397
    %v2880 = vsel %vm1756, %v1348, %v1399
    %v2881 = vsel %vm1756, %v1351, %v1401
    %v2882 = vsel %vm857, %v2866, %v2627
    %v2883 = vsel %vm857, %v2867, %v2629
    %v2884 = vsel %vm857, %v2868, %v2631
    %v2885 = vsel %vm857, %v2869, %v2633
    %v2886 = vsel %vm857, %v2870, %v2635
    %v2887 = vsel %vm857, %v2871, %v2637
    %v2888 = vsel %vm857, %v2872, %v2639
    %v2889 = vsel %vm857, %v2873, %v2641
    %v2890 = vsel %vm857, %v2874, %v2643
    %v2891 = vsel %vm857, %v2875, %v2645
    %v2892 = vsel %vm857, %v2876, %v2647
    %v2893 = vsel %vm857, %v2877, %v2649
    %v2894 = vsel %vm857, %v2878, %v2651
    %v2895 = vsel %vm857, %v2879, %v2653
    %v2896 = vsel %vm857, %v2880, %v2655
    %v2897 = vsel %vm857, %v2881, %v2657
    %vm2898 = vcmask 785408
    %v2899 = vsel %vm2898, %v2882, %v2691
    %v2900 = vsel %vm2898, %v2883, %v2693
    %v2901 = vsel %vm2898, %v2884, %v2695
    %v2902 = vsel %vm2898, %v2885, %v2697
    %v2903 = vsel %vm2898, %v2886, %v2699
    %v2904 = vsel %vm2898, %v2887, %v2701
    %v2905 = vsel %vm2898, %v2888, %v2703
    %v2906 = vsel %vm2898, %v2889, %v2705
    %v2907 = vsel %vm2898, %v2890, %v2707
    %v2908 = vsel %vm2898, %v2891, %v2709
    %v2909 = vsel %vm2898, %v2892, %v2711
    %v2910 = vsel %vm2898, %v2893, %v2713
    %v2911 = vsel %vm2898, %v2894, %v2715
    %v2912 = vsel %vm2898, %v2895, %v2717
    %v2913 = vsel %vm2898, %v2896, %v2719
    %v2914 = vsel %vm2898, %v2897, %v2721
    %vm2915 = vcmask 793600
    %v2916 = vsel %vm2915, %v2899, %v2755
    %v2917 = vsel %vm2915, %v2900, %v2757
    %v2918 = vsel %vm2915, %v2901, %v2759
    %v2919 = vsel %vm2915, %v2902, %v2761
    %v2920 = vsel %vm2915, %v2903, %v2763
    %v2921 = vsel %vm2915, %v2904, %v2765
    %v2922 = vsel %vm2915, %v2905, %v2767
    %v2923 = vsel %vm2915, %v2906, %v2769
    %v2924 = vsel %vm2915, %v2907, %v2771
    %v2925 = vsel %vm2915, %v2908, %v2773
    %v2926 = vsel %vm2915, %v2909, %v2775
    %v2927 = vsel %vm2915, %v2910, %v2777
    %v2928 = vsel %vm2915, %v2911, %v2779
    %v2929 = vsel %vm2915, %v2912, %v2781
    %v2930 = vsel %vm2915, %v2913, %v2783
    %v2931 = vsel %vm2915, %v2914, %v2785
    %vm2932 = vcmask 801792
    %v2933 = vsel %vm2932, %v2916, %v2819
    %v2934 = vsel %vm2932, %v2917, %v2821
    %v2935 = vsel %vm2932, %v2918, %v2823
    %v2936 = vsel %vm2932, %v2919, %v2825
    %v2937 = vsel %vm2932, %v2920, %v2827
    %v2938 = vsel %vm2932, %v2921, %v2829
    %v2939 = vsel %vm2932, %v2922, %v2831
    %v2940 = vsel %vm2932, %v2923, %v2833
    %v2941 = vsel %vm2932, %v2924, %v2835
    %v2942 = vsel %vm2932, %v2925, %v2837
    %v2943 = vsel %vm2932, %v2926, %v2839
    %v2944 = vsel %vm2932, %v2927, %v2841
    %v2945 = vsel %vm2932, %v2928, %v2843
    %v2946 = vsel %vm2932, %v2929, %v2845
    %v2947 = vsel %vm2932, %v2930, %v2847
    %v2948 = vsel %vm2932, %v2931, %v2849
    %vm2949 = vcmask 809984
    %v2950 = vsel %vm2949, %v2933, 0.0
    %v2951 = vsel %vm2949, %v2934, 0.0
    %v2952 = vsel %vm2949, %v2935, 0.0
    %v2953 = vsel %vm2949, %v2936, 0.0
    %v2954 = vsel %vm2949, %v2937, 0.0
    %v2955 = vsel %vm2949, %v2938, 0.0
    %v2956 = vsel %vm2949, %v2939, 0.0
    %v2957 = vsel %vm2949, %v2940, 0.0
    %v2958 = vsel %vm2949, %v2941, 0.0
    %v2959 = vsel %vm2949, %v2942, 0.0
    %v2960 = vsel %vm2949, %v2943, 0.0
    %v2961 = vsel %vm2949, %v2944, 0.0
    %v2962 = vsel %vm2949, %v2945, 0.0
    %v2963 = vsel %vm2949, %v2946, 0.0
    %v2964 = vsel %vm2949, %v2947, 0.0
    %v2965 = vsel %vm2949, %v2948, 0.0
    %2966 = vst [vmem:[#allocation2] sm:$0xff] %v2950
    %2967 = vst [vmem:[#allocation2 + $0x8] sm:$0xff] %v2951
    %2968 = vst [vmem:[#allocation2 + $0x10] sm:$0xff] %v2952
    %2969 = vst [vmem:[#allocation2 + $0x18] sm:$0xff] %v2953
    %2970 = vst [vmem:[#allocation2 + $0x20] sm:$0xff] %v2954
    %2971 = vst [vmem:[#allocation2 + $0x28] sm:$0xff] %v2955
    %2972 = vst [vmem:[#allocation2 + $0x30] sm:$0xff] %v2956
    %2973 = vst [vmem:[#allocation2 + $0x38] sm:$0xff] %v2957
    %2974 = vst [vmem:[#allocation2 + $0x40] sm:$0xff] %v2958
    %2975 = vst [vmem:[#allocation2 + $0x48] sm:$0xff] %v2959
    %2976 = vst [vmem:[#allocation2 + $0x50] sm:$0xff] %v2960
    %2977 = vst [vmem:[#allocation2 + $0x58] sm:$0xff] %v2961
    %2978 = vst [vmem:[#allocation2 + $0x60] sm:$0xff] %v2962
    %2979 = vst [vmem:[#allocation2 + $0x68] sm:$0xff] %v2963
    %2980 = vst [vmem:[#allocation2 + $0x70] sm:$0xff] %v2964
    %2981 = vst [vmem:[#allocation2 + $0x78] sm:$0xff] %v2965
    %2982 = vst [vmem:[#allocation4] sm:$0xff] %v2578
    %2983 = vst [vmem:[#allocation4 + $0x8] sm:$0xff] %v2579
    %2984 = vst [vmem:[#allocation4 + $0x10] sm:$0xff] %v2580
    %2985 = vst [vmem:[#allocation4 + $0x18] sm:$0xff] %v2581
    %2986 = vst [vmem:[#allocation4 + $0x20] sm:$0xff] %v2582
    %2987 = vst [vmem:[#allocation4 + $0x28] sm:$0xff] %v2583
    %2988 = vst [vmem:[#allocation4 + $0x30] sm:$0xff] %v2584
    %2989 = vst [vmem:[#allocation4 + $0x38] sm:$0xff] %v2585
    %2990 = vst [vmem:[#allocation4 + $0x40] sm:$0xff] %v2586
    %2991 = vst [vmem:[#allocation4 + $0x48] sm:$0xff] %v2587
    %2992 = vst [vmem:[#allocation4 + $0x50] sm:$0xff] %v2588
    %2993 = vst [vmem:[#allocation4 + $0x58] sm:$0xff] %v2589
    %2994 = vst [vmem:[#allocation4 + $0x60] sm:$0xff] %v2590
    %2995 = vst [vmem:[#allocation4 + $0x68] sm:$0xff] %v2591
    %2996 = vst [vmem:[#allocation4 + $0x70] sm:$0xff] %v2592
    %2997 = vst [vmem:[#allocation4 + $0x78] sm:$0xff] %v2593
    %2998 = vst [vmem:[#allocation4 + $0x80] sm:$0xff] %v2594
    %2999 = vst [vmem:[#allocation4 + $0x88] sm:$0xff] %v2595
    %3000 = vst [vmem:[#allocation4 + $0x90] sm:$0xff] %v2596
    %3001 = vst [vmem:[#allocation4 + $0x98] sm:$0xff] %v2597
    %3002 = vst [vmem:[#allocation4 + $0xa0] sm:$0xff] %v2598
    %3003 = vst [vmem:[#allocation4 + $0xa8] sm:$0xff] %v2599
    %3004 = vst [vmem:[#allocation4 + $0xb0] sm:$0xff] %v2600
    %3005 = vst [vmem:[#allocation4 + $0xb8] sm:$0xff] %v2601
    %3006 = vst [vmem:[#allocation4 + $0xc0] sm:$0xff] %v2602
    %3007 = vst [vmem:[#allocation4 + $0xc8] sm:$0xff] %v2603
    %3008 = vst [vmem:[#allocation4 + $0xd0] sm:$0xff] %v2604
    %3009 = vst [vmem:[#allocation4 + $0xd8] sm:$0xff] %v2605
    %3010 = vst [vmem:[#allocation4 + $0xe0] sm:$0xff] %v2606
    %3011 = vst [vmem:[#allocation4 + $0xe8] sm:$0xff] %v2607
    %3012 = vst [vmem:[#allocation4 + $0xf0] sm:$0xff] %v2608
    %3013 = vst [vmem:[#allocation4 + $0xf8] sm:$0xff] %v2609
    // Predicated region
    $region14: #{tpu_custom_call.1} parent=1 // pred_check
      _
    $region15: #{tpu_custom_call.1} parent=1 // pred_check_branch
      %3015 = sbr.rel (0) target = $region17
    $region16: #{tpu_custom_call.1} parent=1 // pred_region
      %s3017 = ssub.s32 2048, 2048
      %3018 = vsyncadd [#allocation3], %s3017
      %s3019 = sshll.u32 [#allocation2], 4
      %s3020 = int_to_ptr.vmem [resolvable:$true] %s3019
      %3025 = dma.vmem_to_hbm [thread:$0]  %s3020, 2048, %s3, [#allocation3], 128, 128, 8
    $region17: #{tpu_custom_call.1} parent=1 // pred_fallthru
      _
    // Predicated region
    $region18: #{tpu_custom_call.1} parent=1 // pred_check
      _
    $region19: #{tpu_custom_call.1} parent=1 // pred_check_branch
      %3027 = sbr.rel (0) target = $region21
    $region20: #{tpu_custom_call.1} parent=1 // pred_region
      %s3029 = ssub.s32 4096, 4096
      %3030 = vsyncadd [#allocation5], %s3029
      %s3031 = sshll.u32 [#allocation4], 4
      %s3032 = int_to_ptr.vmem [resolvable:$true] %s3031
      %3037 = dma.vmem_to_hbm [thread:$0]  %s3032, 4096, %s4, [#allocation5], 256, 256, 16
    $region21: #{tpu_custom_call.1} parent=1 // pred_fallthru
      _
    // Predicated region
    $region22: #{tpu_custom_call.1} parent=1 // pred_check
      _
    $region23: #{tpu_custom_call.1} parent=1 // pred_check_branch
      %3039 = sbr.rel (0) target = $region25
    $region24: #{tpu_custom_call.1} parent=1 // pred_region
      %3040 = dma.done [#allocation3], 2048
    $region25: #{tpu_custom_call.1} parent=1 // pred_fallthru
      _
    // Predicated region
    $region26: #{tpu_custom_call.1} parent=1 // pred_check
      _
    $region27: #{tpu_custom_call.1} parent=1 // pred_check_branch
      %3042 = sbr.rel (0) target = $region29
    $region28: #{tpu_custom_call.1} parent=1 // pred_region
      %3043 = dma.done [#allocation5], 4096
    $region29: #{tpu_custom_call.1} parent=1 // pred_fallthru
      _
    %3044 = vsyncpa [#allocation3], 1
    %3045 = vsyncpa [#allocation5], 1

</llo_original>
